<compile_context>
chip_gen: v6e
topology: v6e:2x2x1
jax: 0.10.0
libtpu: 0.0.40
codegen_flags: <defaults>
</compile_context>

<pallas_src>
import math
from functools import partial

import jax
import jax.numpy as jnp
from jax.experimental import pallas as pl
from jax.experimental.pallas import tpu as pltpu


# --------------------------------------------------------------------------- helpers
def _matmul_nt(a, b):
    """a @ b.T with fp32 accumulation (PyTorch nn.Linear convention: W is (out, in))."""
    return jax.lax.dot_general(
        a, b, (((1,), (1,)), ((), ())), preferred_element_type=jnp.float32
    )


def _erf_approx(x):
    # Abramowitz & Stegun 7.1.26, |err| < 1.5e-7 in fp32; avoids relying on an erf lowering.
    a1, a2, a3, a4, a5 = 0.254829592, -0.284496736, 1.421413741, -1.453152027, 1.061405429
    p_ = 0.3275911
    sgn = jnp.sign(x)
    ax = jnp.abs(x)
    t_ = 1.0 / (1.0 + p_ * ax)
    poly = ((((a5 * t_ + a4) * t_ + a3) * t_ + a2) * t_ + a1) * t_
    return sgn * (1.0 - poly * jnp.exp(-ax * ax))


def sinusoidal_position_embeddings(t, dim):
    # TODO(synk): SinusoidalPositionEmbeddings is not defined in the provided source file;
    # this is the standard DDPM sinusoidal embedding (sin/cos of log-spaced frequencies).
    half = dim // 2
    scale = math.log(10000.0) / (half - 1)
    freqs = jnp.exp(jnp.arange(half, dtype=jnp.float32) * -scale)
    args = t.astype(jnp.float32)[:, None] * freqs[None, :]
    return jnp.concatenate([jnp.sin(args), jnp.cos(args)], axis=-1)  # (B, dim)


# ============================================================ strategy: cross_attention
def _cross_attn_kernel(x1t_ref, x2_ref, w_ref, bcol_ref, o_ref, *, num_heads):
    """One (batch, query-block) grid step.

    x1t_ref : (1, TQ, E)  query source, spatial on the sublane axis
    x2_ref  : (1, E, L)   key/value source, spatial (H*W) lane-dense
    w_ref   : ((2+nh)*E + 1, E) packed folded weights:
                rows [0,E)          : Wq_fold * 1/sqrt(hd)
                rows [E,2E)         : Wk_fold
                rows [(2+h)E,(3+h)E): Wvo_h = Wo_h @ Wv_fold_h   (out_proj folded into V)
                last row            : bq_fold * 1/sqrt(hd)       (row bias)
    bcol_ref: (E, 1+nh) column biases: [:,0] = bk_fold, [:,1+h] = bvo_h
              (out_proj bias folded into head 0's bvo — exact, softmax rows sum to 1)
    o_ref   : (1, E, TQ)  lane-dense output block (natural NCHW layout)
    """
    nh = num_heads
    x1t = x1t_ref[0]                                   # (TQ, E)
    x2 = x2_ref[0]                                     # (E, L)
    TQ, E = x1t.shape
    hd = E // nh

    w = w_ref[...]
    bcol = bcol_ref[...]
    wq = w[0:E]                                        # (E, E)
    wk = w[E:2 * E]                                    # (E, E)
    bq = w[(2 + nh) * E:(2 + nh) * E + 1, :]           # (1, E)
    bk = bcol[:, 0:1]                                  # (E, 1)

    # projections (score scale pre-folded into wq / bq)
    qT = _matmul_nt(x1t, wq) + bq                                          # (TQ, E)
    k_all = jnp.dot(wk, x2, preferred_element_type=jnp.float32) + bk      # (E, L)

    acc = jnp.zeros((E, TQ), jnp.float32)
    for h in range(nh):                                # static unroll (nh is small)
        wvo_h = w[(2 + h) * E:(3 + h) * E]             # (E, E)
        bvo_h = bcol[:, 1 + h:2 + h]                   # (E, 1)
        vo_h = jnp.dot(wvo_h, x2, preferred_element_type=jnp.float32) + bvo_h  # (E, L)

        # scores via VPU broadcast-FMA: contraction length is head_dim (tiny),
        # so the MXU would be ~1% utilized; rank-1 updates on the VPU instead.
        c0 = h * hd
        s = qT[:, c0:c0 + 1] * k_all[c0:c0 + 1, :]                          # (TQ, L)
        for d in range(1, hd):
            s = s + qT[:, c0 + d:c0 + d + 1] * k_all[c0 + d:c0 + d + 1, :]

        # softmax over keys (lane axis); reciprocal goes to the EUP slot
        m = jnp.max(s, axis=-1, keepdims=True)
        p = jnp.exp(s - m)
        l = jnp.sum(p, axis=-1, keepdims=True)
        pn = p * pl.reciprocal(l, approx=True)                              # (TQ, L)

        # out_proj-folded value contraction: K = L on the MXU (lane-dense)
        acc = acc + _matmul_nt(vo_h, pn)                                    # (E, TQ)

    o_ref[0] = acc.astype(o_ref.dtype)


def fusion_cross_attention(x1, x2, params, num_heads):
    B, C, H, W = x1.shape
    E, L = C, H * W
    nh = num_heads
    hd = E // nh
    scale = 1.0 / math.sqrt(hd)

    # Natural NCHW layout for keys/values and the output (lane dim = H*W).
    x2r = x2.reshape(B, E, L)
    # x1 transposed once (tiny) so queries sit on the sublane axis inside the kernel.
    x1t = x1.reshape(B, E, L).transpose(0, 2, 1)        # (B, L, E)

    # ---- fold query/key/value_proj into in_proj, and out_proj into the value path
    wqi, wki, wvi = jnp.split(params['in_proj_w'], 3, axis=0)   # (E, E) each
    bqi, bki, bvi = jnp.split(params['in_proj_b'], 3, axis=0)   # (E,) each
    bq_p = params['bq_p'].reshape(-1)
    bk_p = params['bk_p'].reshape(-1)
    bv_p = params['bv_p'].reshape(-1)
    bo = params['bo'].reshape(-1)

    wq_f = (wqi @ params['wq_p']) * scale               # folded + pre-scaled
    bq_f = (wqi @ bq_p + bqi) * scale
    wk_f = wki @ params['wk_p']
    bk_f = wki @ bk_p + bki
    wv_f = wvi @ params['wv_p']
    bv_f = wvi @ bv_p + bvi

    wvo, bvo = [], []
    for h in range(nh):
        wo_h = params['wo'][:, h * hd:(h + 1) * hd]     # (E, hd)
        wvo.append(wo_h @ wv_f[h * hd:(h + 1) * hd, :])  # (E, E)
        bvo.append(wo_h @ bv_f[h * hd:(h + 1) * hd])     # (E,)
    bvo[0] = bvo[0] + bo                                 # exact: softmax rows sum to 1

    w_packed = jnp.concatenate([wq_f, wk_f] + wvo + [bq_f[None, :]], axis=0)  # ((2+nh)E+1, E)
    b_col = jnp.stack([bk_f] + bvo, axis=1)                                   # (E, 1+nh)

    # Tile queries in 128-row blocks to keep the (TQ, L) softmax tile at half the vreg file.
    TQ = 128 if (L % 128 == 0) else L
    QB = L // TQ

    out = pl.pallas_call(
        partial(_cross_attn_kernel, num_heads=nh),
        out_shape=jax.ShapeDtypeStruct((B, E, L), x1.dtype),
        grid=(B, QB),
        in_specs=[
            pl.BlockSpec((1, TQ, E), lambda b, q: (b, q, 0)),
            pl.BlockSpec((1, E, L), lambda b, q: (b, 0, 0)),
            pl.BlockSpec(w_packed.shape, lambda b, q: (0, 0)),
            pl.BlockSpec(b_col.shape, lambda b, q: (0, 0)),
        ],
        out_specs=pl.BlockSpec((1, E, TQ), lambda b, q: (b, 0, q)),
        compiler_params=pltpu.CompilerParams(
            dimension_semantics=("parallel", "parallel")),
    )(x1t, x2r, w_packed, b_col)

    # out is already (B, C, H*W): no output transpose needed.
    return out.reshape(B, C, H, W)


def _cross_attention_ref(x1, x2, p, num_heads):
    B, C, H, W = x1.shape
    L, E = H * W, C
    hd = E // num_heads
    x1s = x1.reshape(B, C, L).transpose(0, 2, 1)
    x2s = x2.reshape(B, C, L).transpose(0, 2, 1)
    q_in = x1s @ p['wq_p'].T + p['bq_p']
    k_in = x2s @ p['wk_p'].T + p['bk_p']
    v_in = x2s @ p['wv_p'].T + p['bv_p']
    wqi, wki, wvi = jnp.split(p['in_proj_w'], 3, axis=0)
    bqi, bki, bvi = jnp.split(p['in_proj_b'], 3, axis=0)
    q = q_in @ wqi.T + bqi
    k = k_in @ wki.T + bki
    v = v_in @ wvi.T + bvi
    qh = q.reshape(B, L, num_heads, hd).transpose(0, 2, 1, 3)
    kh = k.reshape(B, L, num_heads, hd).transpose(0, 2, 1, 3)
    vh = v.reshape(B, L, num_heads, hd).transpose(0, 2, 1, 3)
    s = jnp.einsum('bhqd,bhkd->bhqk', qh, kh) / math.sqrt(hd)
    a = jax.nn.softmax(s, axis=-1)
    o = jnp.einsum('bhqk,bhkd->bhqd', a, vh)
    o = o.transpose(0, 2, 1, 3).reshape(B, L, E)
    out = o @ p['wo'].T + p['bo']
    return out.transpose(0, 2, 1).reshape(B, C, H, W)


# ===================================================================== strategy: add
def _fused_add_kernel(emb_ref, mw_ref, mb_ref, x1_ref, x2_ref, o_ref, *, time_dim):
    """Single fused kernel per batch element: time_mlp + weight_network + weighted add."""
    T = time_dim
    e = emb_ref[0]                        # (1, W0)
    mw = mw_ref[...]                      # (3*T + 1, W0) packed weights
    mb = mb_ref[...]                      # (4, W0)       packed biases

    # time_mlp: Linear(dim, T) -> GELU (exact erf) -> Linear(T, T)
    h = _matmul_nt(e, mw[0:T]) + mb[0:1, 0:T]                        # (1, T)
    h = 0.5 * h * (1.0 + _erf_approx(h * (1.0 / math.sqrt(2.0))))
    temb = _matmul_nt(h, mw[T:2 * T, 0:T]) + mb[1:2, 0:T]            # (1, T)

    # weight_network: Linear(T, T//2) -> ReLU -> Linear(T//2, 1)
    # (zero-padded to width T inside the packed slab; relu(0)=0 keeps padding exact)
    g = jnp.maximum(_matmul_nt(temb, mw[2 * T:3 * T, 0:T]) + mb[2:3, 0:T], 0.0)
    wgt = _matmul_nt(g, mw[3 * T:3 * T + 1, 0:T]) + mb[3:4, 0:1]     # (1, 1)

    # x1 + w * x2 * 0.01, scalar weight broadcast over the (C, H*W) block
    o_ref[0] = (x1_ref[0] + wgt * x2_ref[0] * 0.01).astype(o_ref.dtype)


def fusion_add(x1, x2, t, params):
    B, C, H, W = x1.shape
    HW = H * W
    D = params['dim']
    T = params['tw1'].shape[0]            # time_dim
    W0 = max(D, T)

    emb = sinusoidal_position_embeddings(t, D)                        # (B, D), plain-JAX glue
    emb = jnp.pad(emb, ((0, 0), (0, W0 - D))).reshape(B, 1, W0)

    def pad2(a, rows, cols):
        return jnp.pad(a, ((0, rows - a.shape[0]), (0, cols - a.shape[1])))

    tb1 = params['tb1'].reshape(1, -1)
    tb2 = params['tb2'].reshape(1, -1)
    wb1 = params['wb1'].reshape(1, -1)
    wb2 = params['wb2'].reshape(1, -1)

    mw = jnp.concatenate([
        pad2(params['tw1'], T, W0),       # Linear(dim -> T)
        pad2(params['tw2'], T, W0),       # Linear(T -> T)
        pad2(params['ww1'], T, W0),       # Linear(T -> T//2), zero-padded outputs
        pad2(params['ww2'], 1, W0),       # Linear(T//2 -> 1), zero-padded inputs
    ], axis=0)                            # (3*T + 1, W0)
    mb = jnp.concatenate([
        pad2(tb1, 1, W0), pad2(tb2, 1, W0), pad2(wb1, 1, W0), pad2(wb2, 1, W0),
    ], axis=0)                            # (4, W0)

    x1r = x1.reshape(B, C, HW)
    x2r = x2.reshape(B, C, HW)

    out = pl.pallas_call(
        partial(_fused_add_kernel, time_dim=T),
        out_shape=jax.ShapeDtypeStruct((B, C, HW), x1.dtype),
        grid=(B,),
        in_specs=[
            pl.BlockSpec((1, 1, W0), lambda b: (b, 0, 0)),
            pl.BlockSpec(mw.shape, lambda b: (0, 0)),
            pl.BlockSpec(mb.shape, lambda b: (0, 0)),
            pl.BlockSpec((1, C, HW), lambda b: (b, 0, 0)),
            pl.BlockSpec((1, C, HW), lambda b: (b, 0, 0)),
        ],
        out_specs=pl.BlockSpec((1, C, HW), lambda b: (b, 0, 0)),
        compiler_params=pltpu.CompilerParams(dimension_semantics=("parallel",)),
    )(emb, mw, mb, x1r, x2r)

    return out.reshape(B, C, H, W)


def _fusion_add_ref(x1, x2, t, p):
    emb = sinusoidal_position_embeddings(t, p['dim'])
    h = emb @ p['tw1'].T + p['tb1']
    h = 0.5 * h * (1.0 + jax.scipy.special.erf(h / jnp.sqrt(2.0)))
    t_emb = h @ p['tw2'].T + p['tb2']
    g = jnp.maximum(t_emb @ p['ww1'].T + p['wb1'], 0.0)
    w = g @ p['ww2'].T + p['wb2']                                    # (B, 1)
    return x1 + w[:, :, None, None] * x2 * 0.01


# ================================================================ parameter creation
def init_params(key, embed_dim, dim, time_dim):
    E = embed_dim
    ks = jax.random.split(key, 18)
    s = 0.2
    nrm = lambda k, shape: jax.random.normal(k, shape, jnp.float32) * s
    p_ca = {
        'wq_p': nrm(ks[0], (E, E)), 'bq_p': nrm(ks[1], (1, E)),
        'wk_p': nrm(ks[2], (E, E)), 'bk_p': nrm(ks[3], (1, E)),
        'wv_p': nrm(ks[4], (E, E)), 'bv_p': nrm(ks[5], (1, E)),
        'in_proj_w': nrm(ks[6], (3 * E, E)), 'in_proj_b': nrm(ks[7], (3 * E,)),
        'wo': nrm(ks[8], (E, E)), 'bo': nrm(ks[9], (1, E)),
    }
    p_add = {
        'dim': dim,
        'tw1': nrm(ks[10], (time_dim, dim)), 'tb1': nrm(ks[11], (1, time_dim)),
        'tw2': nrm(ks[12], (time_dim, time_dim)), 'tb2': nrm(ks[13], (1, time_dim)),
        # NOTE: FusionModule.initialize_weights zero-inits the weight_network at
        # construction; random values are used here so the numerical check actually
        # exercises that code path (zeros would always yield w == 0 and mask bugs).
        'ww1': nrm(ks[14], (time_dim // 2, time_dim)),
        'wb1': nrm(ks[15], (1, time_dim // 2)),
        'ww2': nrm(ks[16], (1, time_dim // 2)),
        'wb2': nrm(ks[17], (1, 1)),
    }
    return p_ca, p_add


# ============================================================================== main
if __name__ == "__main__":
    key = jax.random.PRNGKey(0)
    B, C, H, W = 2, 4, 16, 16          # embed_dim == C for the cross_attention branch
    NUM_HEADS = 2
    DIM, TIME_DIM = 32, 32

    k_x1, k_x2, k_p = jax.random.split(key, 3)
    x1 = jax.random.normal(k_x1, (B, C, H, W), jnp.float32)
    x2 = jax.random.normal(k_x2, (B, C, H, W), jnp.float32)
    t = jnp.array([3.0, 11.0], dtype=jnp.float32)

    p_ca, p_add = init_params(k_p, C, DIM, TIME_DIM)

    # --- strategy == 'cross_attention'
    out_ca = fusion_cross_attention(x1, x2, p_ca, NUM_HEADS)
    jax.block_until_ready(out_ca)
    ref_ca = _cross_attention_ref(x1, x2, p_ca, NUM_HEADS)
    assert out_ca.shape == (B, C, H, W)
    # tolerance allows for the approximate EUP reciprocal in the softmax normalization
    assert bool(jnp.allclose(out_ca, ref_ca, atol=5e-3, rtol=5e-3)), "cross_attention mismatch"

    # --- strategy == 'add'
    out_add = fusion_add(x1, x2, t, p_add)
    jax.block_until_ready(out_add)
    ref_add = _fusion_add_ref(x1, x2, t, p_add)
    assert out_add.shape == (B, C, H, W)
    assert bool(jnp.allclose(out_add, ref_add, atol=2e-3, rtol=2e-3)), "add mismatch"

    print("KERNEL_OK")
</pallas_src>

<mosaic_0001>
module attributes {stable_mosaic.version = 11 : i64} {
  func.func @_cross_attn_kernel(%arg0: i32, %arg1: i32, %arg2: memref<1x128x4xf32, #tpu.memory_space<vmem>>, %arg3: memref<1x4x256xf32, #tpu.memory_space<vmem>>, %arg4: memref<17x4xf32, #tpu.memory_space<vmem>>, %arg5: memref<4x3xf32, #tpu.memory_space<vmem>>, %arg6: memref<1x4x128xf32, #tpu.memory_space<vmem>>) attributes {dimension_semantics = [#tpu.dimension_semantics<parallel>, #tpu.dimension_semantics<parallel>], iteration_bounds = array<i64: 2, 2>, scalar_prefetch = 0 : i64, scratch_operands = 0 : i64, tpu.core_type = #tpu.core_type<tc>, window_params = [{transform_indices = @transform_0, window_bounds = array<i64: 1, 128, 4>}, {transform_indices = @transform_1, window_bounds = array<i64: 1, 4, 256>}, {pipeline_mode = #tpu.pipeline_mode<synchronous>, transform_indices = @transform_2, window_bounds = array<i64: 17, 4>}, {pipeline_mode = #tpu.pipeline_mode<synchronous>, transform_indices = @transform_3, window_bounds = array<i64: 4, 3>}, {transform_indices = @transform_4, window_bounds = array<i64: 1, 4, 128>}]} {
    %c0 = arith.constant 0 : index
    %c0_0 = arith.constant 0 : index
    %c0_1 = arith.constant 0 : index
    %0 = vector.load %arg2[%c0, %c0_0, %c0_1] : memref<1x128x4xf32, #tpu.memory_space<vmem>>, vector<1x128x4xf32>
    %1 = vector.shape_cast %0 : vector<1x128x4xf32> to vector<128x4xf32>
    %c0_2 = arith.constant 0 : index
    %c0_3 = arith.constant 0 : index
    %c0_4 = arith.constant 0 : index
    %2 = vector.load %arg3[%c0_2, %c0_3, %c0_4] : memref<1x4x256xf32, #tpu.memory_space<vmem>>, vector<1x4x256xf32>
    %3 = vector.shape_cast %2 : vector<1x4x256xf32> to vector<4x256xf32>
    %c0_5 = arith.constant 0 : index
    %c0_6 = arith.constant 0 : index
    %4 = vector.load %arg4[%c0_5, %c0_6] : memref<17x4xf32, #tpu.memory_space<vmem>>, vector<17x4xf32>
    %c0_7 = arith.constant 0 : index
    %c0_8 = arith.constant 0 : index
    %5 = vector.load %arg5[%c0_7, %c0_8] : memref<4x3xf32, #tpu.memory_space<vmem>>, vector<4x3xf32>
    %6 = vector.extract_strided_slice %4 {offsets = [0, 0], sizes = [4, 4], strides = [1, 1]} : vector<17x4xf32> to vector<4x4xf32>
    %7 = vector.extract_strided_slice %4 {offsets = [4, 0], sizes = [4, 4], strides = [1, 1]} : vector<17x4xf32> to vector<4x4xf32>
    %8 = vector.extract_strided_slice %4 {offsets = [16, 0], sizes = [1, 4], strides = [1, 1]} : vector<17x4xf32> to vector<1x4xf32>
    %9 = vector.extract_strided_slice %5 {offsets = [0, 0], sizes = [4, 1], strides = [1, 1]} : vector<4x3xf32> to vector<4x1xf32>
    %cst = arith.constant dense<0.000000e+00> : vector<128x4xf32>
    %10 = tpu.matmul %1, %6, %cst {dimension_numbers = #tpu.dot_dimension_numbers<[1], [1], [0], [0], [0, 0, 1, 0], [], []>} : vector<128x4xf32>, vector<4x4xf32>, vector<128x4xf32> -> vector<128x4xf32>
    %11 = vector.broadcast %8 : vector<1x4xf32> to vector<128x4xf32>
    %12 = arith.addf %10, %11 : vector<128x4xf32>
    %cst_9 = arith.constant dense<0.000000e+00> : vector<4x256xf32>
    %13 = tpu.matmul %7, %3, %cst_9 {dimension_numbers = #tpu.dot_dimension_numbers<[1], [0], [0], [1], [0, 0, 1, 1], [], []>} : vector<4x4xf32>, vector<4x256xf32>, vector<4x256xf32> -> vector<4x256xf32>
    %14 = vector.broadcast %9 : vector<4x1xf32> to vector<4x256xf32>
    %15 = arith.addf %13, %14 : vector<4x256xf32>
    %cst_10 = arith.constant 0.000000e+00 : f32
    %16 = vector.broadcast %cst_10 : f32 to vector<4x128xf32>
    %17 = vector.extract_strided_slice %4 {offsets = [8, 0], sizes = [4, 4], strides = [1, 1]} : vector<17x4xf32> to vector<4x4xf32>
    %18 = vector.extract_strided_slice %5 {offsets = [0, 1], sizes = [4, 1], strides = [1, 1]} : vector<4x3xf32> to vector<4x1xf32>
    %cst_11 = arith.constant dense<0.000000e+00> : vector<4x256xf32>
    %19 = tpu.matmul %17, %3, %cst_11 {dimension_numbers = #tpu.dot_dimension_numbers<[1], [0], [0], [1], [0, 0, 1, 1], [], []>} : vector<4x4xf32>, vector<4x256xf32>, vector<4x256xf32> -> vector<4x256xf32>
    %20 = vector.broadcast %18 : vector<4x1xf32> to vector<4x256xf32>
    %21 = arith.addf %19, %20 : vector<4x256xf32>
    %22 = vector.extract_strided_slice %12 {offsets = [0, 0], sizes = [128, 1], strides = [1, 1]} : vector<128x4xf32> to vector<128x1xf32>
    %23 = vector.extract_strided_slice %15 {offsets = [0, 0], sizes = [1, 256], strides = [1, 1]} : vector<4x256xf32> to vector<1x256xf32>
    %24 = vector.broadcast %22 : vector<128x1xf32> to vector<128x256xf32>
    %25 = vector.broadcast %23 : vector<1x256xf32> to vector<128x256xf32>
    %26 = arith.mulf %24, %25 : vector<128x256xf32>
    %27 = vector.extract_strided_slice %12 {offsets = [0, 1], sizes = [128, 1], strides = [1, 1]} : vector<128x4xf32> to vector<128x1xf32>
    %28 = vector.extract_strided_slice %15 {offsets = [1, 0], sizes = [1, 256], strides = [1, 1]} : vector<4x256xf32> to vector<1x256xf32>
    %29 = vector.broadcast %27 : vector<128x1xf32> to vector<128x256xf32>
    %30 = vector.broadcast %28 : vector<1x256xf32> to vector<128x256xf32>
    %31 = arith.mulf %29, %30 : vector<128x256xf32>
    %32 = arith.addf %26, %31 : vector<128x256xf32>
    %cst_12 = arith.constant dense<0xFF800000> : vector<128xf32>
    %33 = vector.multi_reduction <maximumf>, %32, %cst_12 [1] : vector<128x256xf32> to vector<128xf32>
    %34 = vector.shape_cast %33 : vector<128xf32> to vector<128x1xf32>
    %35 = vector.broadcast %34 : vector<128x1xf32> to vector<128x256xf32>
    %36 = arith.subf %32, %35 : vector<128x256xf32>
    %37 = math.exp %36 : vector<128x256xf32>
    %cst_13 = arith.constant dense<0.000000e+00> : vector<128xf32>
    %38 = vector.multi_reduction <add>, %37, %cst_13 [1] : vector<128x256xf32> to vector<128xf32>
    %39 = vector.shape_cast %38 : vector<128xf32> to vector<128x1xf32>
    %40 = tpu.reciprocal %39 {approx = true} : vector<128x1xf32> -> vector<128x1xf32>
    %41 = vector.broadcast %40 : vector<128x1xf32> to vector<128x256xf32>
    %42 = arith.mulf %37, %41 : vector<128x256xf32>
    %cst_14 = arith.constant dense<0.000000e+00> : vector<4x128xf32>
    %43 = tpu.matmul %21, %42, %cst_14 {dimension_numbers = #tpu.dot_dimension_numbers<[1], [1], [0], [0], [0, 0, 1, 0], [], []>} : vector<4x256xf32>, vector<128x256xf32>, vector<4x128xf32> -> vector<4x128xf32>
    %44 = arith.addf %16, %43 : vector<4x128xf32>
    %45 = vector.extract_strided_slice %4 {offsets = [12, 0], sizes = [4, 4], strides = [1, 1]} : vector<17x4xf32> to vector<4x4xf32>
    %46 = vector.extract_strided_slice %5 {offsets = [0, 2], sizes = [4, 1], strides = [1, 1]} : vector<4x3xf32> to vector<4x1xf32>
    %cst_15 = arith.constant dense<0.000000e+00> : vector<4x256xf32>
    %47 = tpu.matmul %45, %3, %cst_15 {dimension_numbers = #tpu.dot_dimension_numbers<[1], [0], [0], [1], [0, 0, 1, 1], [], []>} : vector<4x4xf32>, vector<4x256xf32>, vector<4x256xf32> -> vector<4x256xf32>
    %48 = vector.broadcast %46 : vector<4x1xf32> to vector<4x256xf32>
    %49 = arith.addf %47, %48 : vector<4x256xf32>
    %50 = vector.extract_strided_slice %12 {offsets = [0, 2], sizes = [128, 1], strides = [1, 1]} : vector<128x4xf32> to vector<128x1xf32>
    %51 = vector.extract_strided_slice %15 {offsets = [2, 0], sizes = [1, 256], strides = [1, 1]} : vector<4x256xf32> to vector<1x256xf32>
    %52 = vector.broadcast %50 : vector<128x1xf32> to vector<128x256xf32>
    %53 = vector.broadcast %51 : vector<1x256xf32> to vector<128x256xf32>
    %54 = arith.mulf %52, %53 : vector<128x256xf32>
    %55 = vector.extract_strided_slice %12 {offsets = [0, 3], sizes = [128, 1], strides = [1, 1]} : vector<128x4xf32> to vector<128x1xf32>
    %56 = vector.extract_strided_slice %15 {offsets = [3, 0], sizes = [1, 256], strides = [1, 1]} : vector<4x256xf32> to vector<1x256xf32>
    %57 = vector.broadcast %55 : vector<128x1xf32> to vector<128x256xf32>
    %58 = vector.broadcast %56 : vector<1x256xf32> to vector<128x256xf32>
    %59 = arith.mulf %57, %58 : vector<128x256xf32>
    %60 = arith.addf %54, %59 : vector<128x256xf32>
    %cst_16 = arith.constant dense<0xFF800000> : vector<128xf32>
    %61 = vector.multi_reduction <maximumf>, %60, %cst_16 [1] : vector<128x256xf32> to vector<128xf32>
    %62 = vector.shape_cast %61 : vector<128xf32> to vector<128x1xf32>
    %63 = vector.broadcast %62 : vector<128x1xf32> to vector<128x256xf32>
    %64 = arith.subf %60, %63 : vector<128x256xf32>
    %65 = math.exp %64 : vector<128x256xf32>
    %cst_17 = arith.constant dense<0.000000e+00> : vector<128xf32>
    %66 = vector.multi_reduction <add>, %65, %cst_17 [1] : vector<128x256xf32> to vector<128xf32>
    %67 = vector.shape_cast %66 : vector<128xf32> to vector<128x1xf32>
    %68 = tpu.reciprocal %67 {approx = true} : vector<128x1xf32> -> vector<128x1xf32>
    %69 = vector.broadcast %68 : vector<128x1xf32> to vector<128x256xf32>
    %70 = arith.mulf %65, %69 : vector<128x256xf32>
    %cst_18 = arith.constant dense<0.000000e+00> : vector<4x128xf32>
    %71 = tpu.matmul %49, %70, %cst_18 {dimension_numbers = #tpu.dot_dimension_numbers<[1], [1], [0], [0], [0, 0, 1, 0], [], []>} : vector<4x256xf32>, vector<128x256xf32>, vector<4x128xf32> -> vector<4x128xf32>
    %72 = arith.addf %44, %71 : vector<4x128xf32>
    %c0_19 = arith.constant 0 : index
    %c0_20 = arith.constant 0 : index
    %c0_21 = arith.constant 0 : index
    %73 = vector.load %arg6[%c0_19, %c0_20, %c0_21] : memref<1x4x128xf32, #tpu.memory_space<vmem>>, vector<1x4x128xf32>
    %74 = vector.shape_cast %73 : vector<1x4x128xf32> to vector<4x128xf32>
    %75 = vector.shape_cast %72 : vector<4x128xf32> to vector<1x4x128xf32>
    tpu.vector_store %arg6[%c0_19, %c0_20, %c0_21], %75 {strides = array<i32>} : memref<1x4x128xf32, #tpu.memory_space<vmem>>, vector<1x4x128xf32>,
    return
  }
  func.func @transform_0(%arg0: i32, %arg1: i32) -> (i32, i32, i32) {
    %c0_i32 = arith.constant 0 : i32
    %c0_i32_0 = arith.constant 0 : i32
    return %arg0, %arg1, %c0_i32 : i32, i32, i32
  }
  func.func @transform_1(%arg0: i32, %arg1: i32) -> (i32, i32, i32) {
    %c0_i32 = arith.constant 0 : i32
    %c0_i32_0 = arith.constant 0 : i32
    %c0_i32_1 = arith.constant 0 : i32
    return %arg0, %c0_i32, %c0_i32_0 : i32, i32, i32
  }
  func.func @transform_2(%arg0: i32, %arg1: i32) -> (i32, i32) {
    %c0_i32 = arith.constant 0 : i32
    %c0_i32_0 = arith.constant 0 : i32
    %c0_i32_1 = arith.constant 0 : i32
    return %c0_i32, %c0_i32_0 : i32, i32
  }
  func.func @transform_3(%arg0: i32, %arg1: i32) -> (i32, i32) {
    %c0_i32 = arith.constant 0 : i32
    %c0_i32_0 = arith.constant 0 : i32
    %c0_i32_1 = arith.constant 0 : i32
    return %c0_i32, %c0_i32_0 : i32, i32
  }
  func.func @transform_4(%arg0: i32, %arg1: i32) -> (i32, i32, i32) {
    %c0_i32 = arith.constant 0 : i32
    %c0_i32_0 = arith.constant 0 : i32
    return %arg0, %c0_i32, %arg1 : i32, i32, i32
  }
}

</mosaic_0001>

<llo_original>
// kernel: tpu_custom_call.1
$region0: #{tpu_custom_call.1}
  #allocation0 [shape = 'u32[]', space=smem, size = 0x4, offset = 0x4, fixed_abs, tag = 'smem constant byte address 0x4 - core index']
  #allocation1 [shape = 'u32[144,128]{1,0:T(1,128)}', space=vmem, size = 0x12000, scoped, tag = 'internal scratch']
  %s0 = inlined_call_operand.vmem [shape: f32[2,256,4], index: 0, kind: input, shape index: {}]
  %s1 = inlined_call_operand.vmem [shape: f32[2,4,256], index: 1, kind: input, shape index: {}]
  %s2 = inlined_call_operand.vmem [shape: f32[17,4], index: 2, kind: input, shape index: {}]
  %s3 = inlined_call_operand.vmem [shape: f32[4,3], index: 3, kind: input, shape index: {}]
  %s4 = inlined_call_operand.hbm [shape: f32[2,4,256], index: 4, kind: output, shape index: {}]
  %s5 = sld [smem:[#allocation0]]
  $region49: #{tpu_custom_call.1} parent=0
    _
  %s7 = ssub.s32 1, %s5
  %s8 = scalar_select 0, %s7, %s5
  $region1: #{tpu_custom_call.1} parent=0
    #allocation2 [shape = 'u8[4096]{0}', space=vmem, size = 0x1000, scoped, tag = 'output window, operand 0']
    #allocation3 [shape = 's32[2]{0}', space=sflag, size = 0x8, scoped, tag = 'scoped memory for tpu_custom_call.1']
    %9 = vsyncpa [#allocation3], 0
    %s10 = scalar_lea.sflag [#allocation3], 1
    %11 = vsyncpa %s10, 0
    loop: start=0, step=1, limit=6
    $region2: #{tpu_custom_call.1} parent=1 // loop_pre_header
      _
    $region3: #{tpu_custom_call.1} parent=1 // loop_header
      %s13 = sphi 0, %s17
      %p14 = scmp.ge.s32.totalorder %s13, 6
      %s20 = sphi 0, %s32
      %s21 = sphi 0, %s28
      %s22 = sphi 0, %s20
      %s23 = sphi 0, %s21
      %s24 = sphi 0, %s22
      %s25 = sphi 0, %s23
      %s37 = sphi 0, %s39
      %s40 = sphi 0, %s37
      %s41 = sphi 0, %s40
      %s57 = sphi 0, %s41
      %s63 = sphi 0, %s65
      %s66 = sphi 0, %s63
      %s67 = sphi 0, %s66
      %s83 = sphi 0, %s67
      %s87 = sphi 0, %s87
      %s89 = sphi 0, %s87
      %s90 = sphi 0, %s89
      %s104 = sphi 0, %s90
      %s108 = sphi 0, %s108
      %s110 = sphi 0, %s108
      %s111 = sphi 0, %s110
      %s125 = sphi 0, %s111
      %s133 = sphi 0, %s135
      %s136 = sphi 0, %s133
      %s137 = sphi 0, %s136
      %s153 = sphi 0, %s137
    $region4: #{tpu_custom_call.1} parent=1 // loop_header_branch
      %16 = sbr.rel (%p14) target = $region8
    $region5: #{tpu_custom_call.1} parent=1 // loop_body
      %s18 = ssub.s32 %s13, 1
      %s19 = ssub.s32 %s13, 2
      %s26 = sadd.s32 1, %s21
      %p27 = scmp.ge.s32.totalorder %s26, 2
      %s28 = scalar_select %p27, 0, %s26
      %s29 = sadd.s32 1, %s20
      %s30 = scalar_select %p27, %s29, %s20
      %p31 = scmp.ge.s32.totalorder %s30, 2
      %s32 = scalar_select %p31, 0, %s30
      %s33 = ssub.s32 %s20, %s32
      %s34 = ssub.s32 %s21, %s28
      %s35 = sor.u32 %s33, %s34
      %p36 = scmp.eq.s32.totalorder %s35, 0
      %s38 = sadd.s32 %s37, 1
      %s39 = scalar_select %p36, %s37, %s38
      %p42 = pneg %p36
      %p43 = scmp.eq.s32.totalorder %s13, 3
      %p44 = por %p42, %p43
      %p45 = scmp.ne.s32.totalorder %s37, %s40
      %p46 = scmp.eq.s32.totalorder %s13, 0
      %p47 = por %p45, %p46
      %p48 = scmp.ne.s32.totalorder %s37, %s40
      %p49 = scmp.eq.s32.totalorder %s18, 3
      %p50 = por %p48, %p49
      %p51 = scmp.ne.s32.totalorder %s40, %s41
      %p52 = scmp.eq.s32.totalorder %s18, 0
      %p53 = por %p51, %p52
      %p54 = scmp.ne.s32.totalorder %s40, %s41
      %p55 = scmp.eq.s32.totalorder %s19, 3
      %p56 = por %p54, %p55
      %p58 = scmp.ne.s32.totalorder %s41, %s57
      %p59 = scmp.eq.s32.totalorder %s19, 0
      %p60 = por %p58, %p59
      %s61 = ssub.s32 %s20, %s32
      %p62 = scmp.eq.s32.totalorder %s61, 0
      %s64 = sadd.s32 %s63, 1
      %s65 = scalar_select %p62, %s63, %s64
      %p68 = pneg %p62
      %p69 = scmp.eq.s32.totalorder %s13, 3
      %p70 = por %p68, %p69
      %p71 = scmp.ne.s32.totalorder %s63, %s66
      %p72 = scmp.eq.s32.totalorder %s13, 0
      %p73 = por %p71, %p72
      %p74 = scmp.ne.s32.totalorder %s63, %s66
      %p75 = scmp.eq.s32.totalorder %s18, 3
      %p76 = por %p74, %p75
      %p77 = scmp.ne.s32.totalorder %s66, %s67
      %p78 = scmp.eq.s32.totalorder %s18, 0
      %p79 = por %p77, %p78
      %p80 = scmp.ne.s32.totalorder %s66, %s67
      %p81 = scmp.eq.s32.totalorder %s19, 3
      %p82 = por %p80, %p81
      %p84 = scmp.ne.s32.totalorder %s67, %s83
      %p85 = scmp.eq.s32.totalorder %s19, 0
      %p86 = por %p84, %p85
      %s88 = sadd.s32 %s87, 1
      %p91 = scmp.eq.s32.totalorder %s13, 3
      %p92 = scmp.ne.s32.totalorder %s87, %s89
      %p93 = scmp.eq.s32.totalorder %s13, 0
      %p94 = por %p92, %p93
      %p95 = scmp.ne.s32.totalorder %s87, %s89
      %p96 = scmp.eq.s32.totalorder %s18, 3
      %p97 = por %p95, %p96
      %p98 = scmp.ne.s32.totalorder %s89, %s90
      %p99 = scmp.eq.s32.totalorder %s18, 0
      %p100 = por %p98, %p99
      %p101 = scmp.ne.s32.totalorder %s89, %s90
      %p102 = scmp.eq.s32.totalorder %s19, 3
      %p103 = por %p101, %p102
      %p105 = scmp.ne.s32.totalorder %s90, %s104
      %p106 = scmp.eq.s32.totalorder %s19, 0
      %p107 = por %p105, %p106
      %s109 = sadd.s32 %s108, 1
      %p112 = scmp.eq.s32.totalorder %s13, 3
      %p113 = scmp.ne.s32.totalorder %s108, %s110
      %p114 = scmp.eq.s32.totalorder %s13, 0
      %p115 = por %p113, %p114
      %p116 = scmp.ne.s32.totalorder %s108, %s110
      %p117 = scmp.eq.s32.totalorder %s18, 3
      %p118 = por %p116, %p117
      %p119 = scmp.ne.s32.totalorder %s110, %s111
      %p120 = scmp.eq.s32.totalorder %s18, 0
      %p121 = por %p119, %p120
      %p122 = scmp.ne.s32.totalorder %s110, %s111
      %p123 = scmp.eq.s32.totalorder %s19, 3
      %p124 = por %p122, %p123
      %p126 = scmp.ne.s32.totalorder %s111, %s125
      %p127 = scmp.eq.s32.totalorder %s19, 0
      %p128 = por %p126, %p127
      %s129 = ssub.s32 %s20, %s32
      %s130 = ssub.s32 %s21, %s28
      %s131 = sor.u32 %s129, %s130
      %p132 = scmp.eq.s32.totalorder %s131, 0
      %s134 = sadd.s32 %s133, 1
      %s135 = scalar_select %p132, %s133, %s134
      %p138 = pneg %p132
      %p139 = scmp.eq.s32.totalorder %s13, 3
      %p140 = por %p138, %p139
      %p141 = scmp.ne.s32.totalorder %s133, %s136
      %p142 = scmp.eq.s32.totalorder %s13, 0
      %p143 = por %p141, %p142
      %p144 = scmp.ne.s32.totalorder %s133, %s136
      %p145 = scmp.eq.s32.totalorder %s18, 3
      %p146 = por %p144, %p145
      %p147 = scmp.ne.s32.totalorder %s136, %s137
      %p148 = scmp.eq.s32.totalorder %s18, 0
      %p149 = por %p147, %p148
      %p150 = scmp.ne.s32.totalorder %s136, %s137
      %p151 = scmp.eq.s32.totalorder %s19, 3
      %p152 = por %p150, %p151
      %p154 = scmp.ne.s32.totalorder %s137, %s153
      %p155 = scmp.eq.s32.totalorder %s19, 0
      %p156 = por %p154, %p155
      %p157 = scmp.le.s32.totalorder 1, %s13
      %p158 = scmp.lt.s32.totalorder %s13, 5
      %p159 = pnand %p157, %p158
      %p160 = pneg %p159
      // Predicated region
      $region9: #{tpu_custom_call.1} parent=5 // pred_check
        _
      $region10: #{tpu_custom_call.1} parent=5 // pred_check_branch
        %162 = sbr.rel (%p159) target = $region12
      $region11: #{tpu_custom_call.1} parent=5 // pred_region
        %s163 = ssub.s32 %s13, 1
        // Predicated region
        $region13: #{tpu_custom_call.1} parent=11 // pred_check
          %p164 = pneg %p100
        $region14: #{tpu_custom_call.1} parent=11 // pred_check_branch
          %166 = sbr.rel (%p164) target = $region16
        $region15: #{tpu_custom_call.1} parent=11 // pred_region
          _
        $region16: #{tpu_custom_call.1} parent=11 // pred_fallthru
          _
        // Predicated region
        $region17: #{tpu_custom_call.1} parent=11 // pred_check
          %p167 = pneg %p121
        $region18: #{tpu_custom_call.1} parent=11 // pred_check_branch
          %169 = sbr.rel (%p167) target = $region20
        $region19: #{tpu_custom_call.1} parent=11 // pred_region
          _
        $region20: #{tpu_custom_call.1} parent=11 // pred_fallthru
          _
      $region12: #{tpu_custom_call.1} parent=5 // pred_fallthru
        _
      %p170 = scmp.lt.s32.totalorder %s13, 4
      // Predicated region
      $region21: #{tpu_custom_call.1} parent=5 // pred_check
        %p171 = pneg %p170
      $region22: #{tpu_custom_call.1} parent=5 // pred_check_branch
        %173 = sbr.rel (%p171) target = $region24
      $region23: #{tpu_custom_call.1} parent=5 // pred_region
        // Predicated region
        $region25: #{tpu_custom_call.1} parent=23 // pred_check
          %p174 = pneg %p47
        $region26: #{tpu_custom_call.1} parent=23 // pred_check_branch
          %176 = sbr.rel (%p174) target = $region28
        $region27: #{tpu_custom_call.1} parent=23 // pred_region
          %s177 = smul.u32 16, %s21
          %p178 = scmp.lt.s32.totalorder %s20, 1
          %s179 = scalar_select %p178, %s20, 1
          %p180 = scmp.lt.s32.totalorder %s177, 31
          %s181 = scalar_select %p180, %s177, 31
          %s182 = smul.addr %s179, 32
          %s183 = sadd.s32 %s181, %s182
          %s184 = smul.addr %s183, 8
          %s185 = scalar_lea.vmem %s0, %s184
          %s186 = smul.u32 16, %s21
        $region28: #{tpu_custom_call.1} parent=23 // pred_fallthru
          _
        // Predicated region
        $region29: #{tpu_custom_call.1} parent=23 // pred_check
          %p187 = pneg %p73
        $region30: #{tpu_custom_call.1} parent=23 // pred_check_branch
          %189 = sbr.rel (%p187) target = $region32
        $region31: #{tpu_custom_call.1} parent=23 // pred_region
          %p190 = scmp.lt.s32.totalorder %s20, 1
          %s191 = scalar_select %p190, %s20, 1
          %s192 = smul.addr %s191, 2
          %s193 = smul.addr %s192, 4
          %s194 = scalar_lea.vmem %s1, %s193
        $region32: #{tpu_custom_call.1} parent=23 // pred_fallthru
          _
      $region24: #{tpu_custom_call.1} parent=5 // pred_fallthru
        _
      %p195 = scmp.le.s32.totalorder 1, %s13
      %p196 = scmp.lt.s32.totalorder %s13, 5
      %p197 = pnand %p195, %p196
      %p198 = pneg %p197
      // Predicated region
      $region33: #{tpu_custom_call.1} parent=5 // pred_check
        _
      $region34: #{tpu_custom_call.1} parent=5 // pred_check_branch
        %200 = sbr.rel (%p197) target = $region36
      $region35: #{tpu_custom_call.1} parent=5 // pred_region
        %s201 = ssub.s32 %s13, 1
        %s202 = smul.u32 16, %s23
        %p203 = scmp.lt.s32.totalorder %s22, 1
        %s204 = scalar_select %p203, %s22, 1
        %p205 = scmp.lt.s32.totalorder %s202, 31
        %s206 = scalar_select %p205, %s202, 31
        %s207 = smul.addr %s204, 32
        %s208 = sadd.s32 %s206, %s207
        %s209 = smul.addr %s208, 8
        %s210 = scalar_lea.vmem %s0, %s209
        %p211 = pneg %p53
        %p212 = pneg %p50
        %p213 = scmp.lt.s32.totalorder %s22, 1
        %s214 = scalar_select %p213, %s22, 1
        %s215 = smul.addr %s214, 2
        %s216 = smul.addr %s215, 4
        %s217 = scalar_lea.vmem %s1, %s216
        %p218 = pneg %p79
        %p219 = pneg %p76
        %p220 = pneg %p100
        %p221 = pneg %p97
        %p222 = pneg %p121
        %p223 = pneg %p118
        %p224 = pneg %p149
        %p225 = pneg %p146
        %s226 = sand.u32 %s136, 1
        %s227 = scalar_lea.sflag [#allocation3], %s226
        %s228 = sand.u32 %s136, 1
        %s229 = smul.addr %s228, 4
        %s230 = scalar_lea.vmem [#allocation2], %s229
        %s231 = smul.u32 16, %s23
        %p232 = scmp.lt.s32.totalorder %s22, 1
        %s233 = scalar_select %p232, %s22, 1
        %p234 = scmp.lt.s32.totalorder %s231, 31
        %s235 = scalar_select %p234, %s231, 31
        %s236 = smul.addr %s233, 32
        %s237 = sadd.s32 %s235, %s236
        %s238 = smul.addr %s237, 8
        %s239 = scalar_lea.vmem %s0, %s238
        %s240 = smul.u32 16, %s23
        %p241 = scmp.lt.s32.totalorder %s22, 1
        %s242 = scalar_select %p241, %s22, 1
        %s243 = smul.addr %s242, 2
        %s244 = smul.addr %s243, 4
        %s245 = scalar_lea.vmem %s1, %s244
        %v246 = vld [vmem:[%s239] sm:$0xff]
        %v247 = vld [vmem:[%s239 + $0x8] sm:$0xff]
        %v248 = vld [vmem:[%s239 + $0x10] sm:$0xff]
        %v249 = vld [vmem:[%s239 + $0x18] sm:$0xff]
        %v250 = vld [vmem:[%s239 + $0x20] sm:$0xff]
        %v251 = vld [vmem:[%s239 + $0x28] sm:$0xff]
        %v252 = vld [vmem:[%s239 + $0x30] sm:$0xff]
        %v253 = vld [vmem:[%s239 + $0x38] sm:$0xff]
        %v254 = vld [vmem:[%s239 + $0x40] sm:$0xff]
        %v255 = vld [vmem:[%s239 + $0x48] sm:$0xff]
        %v256 = vld [vmem:[%s239 + $0x50] sm:$0xff]
        %v257 = vld [vmem:[%s239 + $0x58] sm:$0xff]
        %v258 = vld [vmem:[%s239 + $0x60] sm:$0xff]
        %v259 = vld [vmem:[%s239 + $0x68] sm:$0xff]
        %v260 = vld [vmem:[%s239 + $0x70] sm:$0xff]
        %v261 = vld [vmem:[%s239 + $0x78] sm:$0xff]
        %v262 = vld [vmem:[%s245] sm:$0xff]
        %v263 = vld [vmem:[%s2] sm:$0xff]
        %v264 = vld [vmem:[%s2 + $0x8] sm:$0xff]
        %v265 = vld [vmem:[%s2 + $0x10] sm:$0x1]
        %v266 = vld [vmem:[%s3] sm:$0xf]
        %v267 = vlaneseq
        %v268 = vshrl.u32 %v267, 7
        %v269 = vsub.s32 0, %v268
        %v270 = vrot.slane %v265, %v269
        %vm271 = vcmask 31744
        %v273 = vsel %vm271, %v246, 0
        %v276 = vsel %vm271, %v247, 0
        %v279 = vsel %vm271, %v248, 0
        %v282 = vsel %vm271, %v249, 0
        %v285 = vsel %vm271, %v250, 0
        %v288 = vsel %vm271, %v251, 0
        %v291 = vsel %vm271, %v252, 0
        %v294 = vsel %vm271, %v253, 0
        %v297 = vsel %vm271, %v254, 0
        %v300 = vsel %vm271, %v255, 0
        %v303 = vsel %vm271, %v256, 0
        %v306 = vsel %vm271, %v257, 0
        %v309 = vsel %vm271, %v258, 0
        %v312 = vsel %vm271, %v259, 0
        %v315 = vsel %vm271, %v260, 0
        %v318 = vsel %vm271, %v261, 0
        %v321 = vsel %vm271, %v263, 0
        %323 = vmatprep.subr.mxu0 0.0
        %324 = vmatpush1.xpose.msra.mxu0 0.0
        %325 = vmatprep.subr.mxu0 0.0
        %326 = vmatpush1.xpose.msra.mxu0 0.0
        %327 = vmatprep.subr.mxu0 0.0
        %328 = vmatpush1.xpose.msra.mxu0 0.0
        %329 = vmatprep.subr.mxu0 0.0
        %330 = vmatpush1.xpose.msra.mxu0 0.0
        %331 = vmatprep.subr.mxu0 0.0
        %332 = vmatpush1.xpose.msra.mxu0 0.0
        %333 = vmatprep.subr.mxu0 0.0
        %334 = vmatpush1.xpose.msra.mxu0 0.0
        %335 = vmatprep.subr.mxu0 0.0
        %336 = vmatpush1.xpose.msra.mxu0 0.0
        %337 = vmatprep.subr.mxu0 0.0
        %338 = vmatpush1.xpose.msra.mxu0 0.0
        %339 = vmatprep.subr.mxu0 0.0
        %340 = vmatpush1.xpose.msra.mxu0 0.0
        %341 = vmatprep.subr.mxu0 0.0
        %342 = vmatpush1.xpose.msra.mxu0 0.0
        %343 = vmatprep.subr.mxu0 0.0
        %344 = vmatpush1.xpose.msra.mxu0 0.0
        %345 = vmatprep.subr.mxu0 0.0
        %346 = vmatpush1.xpose.msra.mxu0 0.0
        %347 = vmatprep.subr.mxu0 0.0
        %348 = vmatpush1.xpose.msra.mxu0 0.0
        %349 = vmatprep.subr.mxu0 0.0
        %350 = vmatpush1.xpose.msra.mxu0 0.0
        %351 = vmatprep.subr.mxu0 0.0
        %352 = vmatpush1.xpose.msra.mxu0 0.0
        %353 = vmatprep.subr.mxu0 0.0
        %354 = vmatpush1.xpose.msra.mxu0 %v321
        %355 = vmatprep.subr.mxu0 0.0
        %356 = vmatpush2.xpose.msra.mxu0 0.0
        %357 = vmatprep.subr.mxu0 0.0
        %358 = vmatpush2.xpose.msra.mxu0 0.0
        %359 = vmatprep.subr.mxu0 0.0
        %360 = vmatpush2.xpose.msra.mxu0 0.0
        %361 = vmatprep.subr.mxu0 0.0
        %362 = vmatpush2.xpose.msra.mxu0 0.0
        %363 = vmatprep.subr.mxu0 0.0
        %364 = vmatpush2.xpose.msra.mxu0 0.0
        %365 = vmatprep.subr.mxu0 0.0
        %366 = vmatpush2.xpose.msra.mxu0 0.0
        %367 = vmatprep.subr.mxu0 0.0
        %368 = vmatpush2.xpose.msra.mxu0 0.0
        %369 = vmatprep.subr.mxu0 0.0
        %370 = vmatpush2.xpose.msra.mxu0 0.0
        %371 = vmatprep.subr.mxu0 0.0
        %372 = vmatpush2.xpose.msra.mxu0 0.0
        %373 = vmatprep.subr.mxu0 0.0
        %374 = vmatpush2.xpose.msra.mxu0 0.0
        %375 = vmatprep.subr.mxu0 0.0
        %376 = vmatpush2.xpose.msra.mxu0 0.0
        %377 = vmatprep.subr.mxu0 0.0
        %378 = vmatpush2.xpose.msra.mxu0 0.0
        %379 = vmatprep.subr.mxu0 0.0
        %380 = vmatpush2.xpose.msra.mxu0 0.0
        %381 = vmatprep.subr.mxu0 0.0
        %382 = vmatpush2.xpose.msra.mxu0 0.0
        %383 = vmatprep.subr.mxu0 0.0
        %384 = vmatpush2.xpose.msra.mxu0 0.0
        %385 = vmatprep.subr.mxu0 0.0
        %386 = vmatpush2.xpose.msra.mxu0 0.0
        %387 = vmatprep.mubr.f32.mxu0 0.0
        %388 = vmatmul.mubr.f32.gmra.mxu0 %v273
        %v389 = vpop.f32.mrf.mxu0
        %v390 = vadd.f32 %v270, %v389
        %v391 = vpop.f32.mrf.mxu0
        %392 = vmatprep.mubr.f32.mxu0 0.0
        %393 = vmatmul.mubr.f32.gmra.mxu0 %v276
        %v394 = vpop.f32.mrf.mxu0
        %v395 = vadd.f32 %v270, %v394
        %v396 = vpop.f32.mrf.mxu0
        %397 = vmatprep.mubr.f32.mxu0 0.0
        %398 = vmatmul.mubr.f32.gmra.mxu0 %v279
        %v399 = vpop.f32.mrf.mxu0
        %v400 = vadd.f32 %v270, %v399
        %v401 = vpop.f32.mrf.mxu0
        %402 = vmatprep.mubr.f32.mxu0 0.0
        %403 = vmatmul.mubr.f32.gmra.mxu0 %v282
        %v404 = vpop.f32.mrf.mxu0
        %v405 = vadd.f32 %v270, %v404
        %v406 = vpop.f32.mrf.mxu0
        %407 = vmatprep.mubr.f32.mxu0 0.0
        %408 = vmatmul.mubr.f32.gmra.mxu0 %v285
        %v409 = vpop.f32.mrf.mxu0
        %v410 = vadd.f32 %v270, %v409
        %v411 = vpop.f32.mrf.mxu0
        %412 = vmatprep.mubr.f32.mxu0 0.0
        %413 = vmatmul.mubr.f32.gmra.mxu0 %v288
        %v414 = vpop.f32.mrf.mxu0
        %v415 = vadd.f32 %v270, %v414
        %v416 = vpop.f32.mrf.mxu0
        %417 = vmatprep.mubr.f32.mxu0 0.0
        %418 = vmatmul.mubr.f32.gmra.mxu0 %v291
        %v419 = vpop.f32.mrf.mxu0
        %v420 = vadd.f32 %v270, %v419
        %v421 = vpop.f32.mrf.mxu0
        %422 = vmatprep.mubr.f32.mxu0 0.0
        %423 = vmatmul.mubr.f32.gmra.mxu0 %v294
        %v424 = vpop.f32.mrf.mxu0
        %v425 = vadd.f32 %v270, %v424
        %v426 = vpop.f32.mrf.mxu0
        %427 = vmatprep.mubr.f32.mxu0 0.0
        %428 = vmatmul.mubr.f32.gmra.mxu0 %v297
        %v429 = vpop.f32.mrf.mxu0
        %v430 = vadd.f32 %v270, %v429
        %v431 = vpop.f32.mrf.mxu0
        %432 = vmatprep.mubr.f32.mxu0 0.0
        %433 = vmatmul.mubr.f32.gmra.mxu0 %v300
        %v434 = vpop.f32.mrf.mxu0
        %v435 = vadd.f32 %v270, %v434
        %v436 = vpop.f32.mrf.mxu0
        %437 = vmatprep.mubr.f32.mxu0 0.0
        %438 = vmatmul.mubr.f32.gmra.mxu0 %v303
        %v439 = vpop.f32.mrf.mxu0
        %v440 = vadd.f32 %v270, %v439
        %v441 = vpop.f32.mrf.mxu0
        %442 = vmatprep.mubr.f32.mxu0 0.0
        %443 = vmatmul.mubr.f32.gmra.mxu0 %v306
        %v444 = vpop.f32.mrf.mxu0
        %v445 = vadd.f32 %v270, %v444
        %v446 = vpop.f32.mrf.mxu0
        %447 = vmatprep.mubr.f32.mxu0 0.0
        %448 = vmatmul.mubr.f32.gmra.mxu0 %v309
        %v449 = vpop.f32.mrf.mxu0
        %v450 = vadd.f32 %v270, %v449
        %v451 = vpop.f32.mrf.mxu0
        %452 = vmatprep.mubr.f32.mxu0 0.0
        %453 = vmatmul.mubr.f32.gmra.mxu0 %v312
        %v454 = vpop.f32.mrf.mxu0
        %v455 = vadd.f32 %v270, %v454
        %v456 = vpop.f32.mrf.mxu0
        %457 = vmatprep.mubr.f32.mxu0 0.0
        %458 = vmatmul.mubr.f32.gmra.mxu0 %v315
        %v459 = vpop.f32.mrf.mxu0
        %v460 = vadd.f32 %v270, %v459
        %v461 = vpop.f32.mrf.mxu0
        %462 = vmatprep.mubr.f32.mxu0 0.0
        %463 = vmatmul.mubr.f32.gmra.mxu0 %v318
        %v464 = vpop.f32.mrf.mxu0
        %v465 = vadd.f32 %v270, %v464
        %v466 = vpop.f32.mrf.mxu0
        %467 = vdwg.mxu0
        %469 = vset.pattern.permute.xlu0 0
        %470 = vperm.xlu0 %469, %v266
        %v471 = vpop.permute.xlu0 %470
        %v473 = vrot.slane %v263, 4
        %v475 = vcombine.high %v262, %v262
        %v476 = vsel %vm271, %v473, 0
        %vm478 = vcmask 1043456
        %v479 = vsel %vm478, %v262, 0
        %v481 = vsel %vm478, %v475, 0
        %483 = vmatprep.subr.mxu0 0.0
        %484 = vmatpush1.msra.mxu0 0.0
        %485 = vmatprep.subr.mxu0 0.0
        %486 = vmatpush1.msra.mxu0 0.0
        %487 = vmatprep.subr.mxu0 0.0
        %488 = vmatpush1.msra.mxu0 0.0
        %489 = vmatprep.subr.mxu0 0.0
        %490 = vmatpush1.msra.mxu0 0.0
        %491 = vmatprep.subr.mxu0 0.0
        %492 = vmatpush1.msra.mxu0 0.0
        %493 = vmatprep.subr.mxu0 0.0
        %494 = vmatpush1.msra.mxu0 0.0
        %495 = vmatprep.subr.mxu0 0.0
        %496 = vmatpush1.msra.mxu0 0.0
        %497 = vmatprep.subr.mxu0 0.0
        %498 = vmatpush1.msra.mxu0 0.0
        %499 = vmatprep.subr.mxu0 0.0
        %500 = vmatpush1.msra.mxu0 0.0
        %501 = vmatprep.subr.mxu0 0.0
        %502 = vmatpush1.msra.mxu0 0.0
        %503 = vmatprep.subr.mxu0 0.0
        %504 = vmatpush1.msra.mxu0 0.0
        %505 = vmatprep.subr.mxu0 0.0
        %506 = vmatpush1.msra.mxu0 0.0
        %507 = vmatprep.subr.mxu0 0.0
        %508 = vmatpush1.msra.mxu0 0.0
        %509 = vmatprep.subr.mxu0 0.0
        %510 = vmatpush1.msra.mxu0 0.0
        %511 = vmatprep.subr.mxu0 0.0
        %512 = vmatpush1.msra.mxu0 0.0
        %513 = vmatprep.subr.mxu0 %v481
        %514 = vmatpush1.msra.mxu0 %v479
        %515 = vmatprep.subr.mxu0 0.0
        %516 = vmatpush2.msra.mxu0 0.0
        %517 = vmatprep.subr.mxu0 0.0
        %518 = vmatpush2.msra.mxu0 0.0
        %519 = vmatprep.subr.mxu0 0.0
        %520 = vmatpush2.msra.mxu0 0.0
        %521 = vmatprep.subr.mxu0 0.0
        %522 = vmatpush2.msra.mxu0 0.0
        %523 = vmatprep.subr.mxu0 0.0
        %524 = vmatpush2.msra.mxu0 0.0
        %525 = vmatprep.subr.mxu0 0.0
        %526 = vmatpush2.msra.mxu0 0.0
        %527 = vmatprep.subr.mxu0 0.0
        %528 = vmatpush2.msra.mxu0 0.0
        %529 = vmatprep.subr.mxu0 0.0
        %530 = vmatpush2.msra.mxu0 0.0
        %531 = vmatprep.subr.mxu0 0.0
        %532 = vmatpush2.msra.mxu0 0.0
        %533 = vmatprep.subr.mxu0 0.0
        %534 = vmatpush2.msra.mxu0 0.0
        %535 = vmatprep.subr.mxu0 0.0
        %536 = vmatpush2.msra.mxu0 0.0
        %537 = vmatprep.subr.mxu0 0.0
        %538 = vmatpush2.msra.mxu0 0.0
        %539 = vmatprep.subr.mxu0 0.0
        %540 = vmatpush2.msra.mxu0 0.0
        %541 = vmatprep.subr.mxu0 0.0
        %542 = vmatpush2.msra.mxu0 0.0
        %543 = vmatprep.subr.mxu0 0.0
        %544 = vmatpush2.msra.mxu0 0.0
        %545 = vmatprep.subr.mxu0 0.0
        %546 = vmatpush2.msra.mxu0 0.0
        %547 = vmatprep.mubr.f32.mxu0 0.0
        %548 = vmatmul.mubr.f32.gmra.mxu0 %v476
        %v549 = vpop.f32.mrf.mxu0
        %v550 = vadd.f32 %v471, %v549
        %v551 = vpop.f32.mrf.mxu0
        %v552 = vadd.f32 %v471, %v551
        %553 = vdwg.mxu0
        %554 = vset.pattern.permute.xlu0 1
        %555 = vperm.xlu0 %554, %v266
        %v556 = vpop.permute.xlu0 %555
        %v559 = vsel %vm271, %v264, 0
        %561 = vmatprep.subr.mxu0 0.0
        %562 = vmatpush1.msra.mxu0 0.0
        %563 = vmatprep.subr.mxu0 0.0
        %564 = vmatpush1.msra.mxu0 0.0
        %565 = vmatprep.subr.mxu0 0.0
        %566 = vmatpush1.msra.mxu0 0.0
        %567 = vmatprep.subr.mxu0 0.0
        %568 = vmatpush1.msra.mxu0 0.0
        %569 = vmatprep.subr.mxu0 0.0
        %570 = vmatpush1.msra.mxu0 0.0
        %571 = vmatprep.subr.mxu0 0.0
        %572 = vmatpush1.msra.mxu0 0.0
        %573 = vmatprep.subr.mxu0 0.0
        %574 = vmatpush1.msra.mxu0 0.0
        %575 = vmatprep.subr.mxu0 0.0
        %576 = vmatpush1.msra.mxu0 0.0
        %577 = vmatprep.subr.mxu0 0.0
        %578 = vmatpush1.msra.mxu0 0.0
        %579 = vmatprep.subr.mxu0 0.0
        %580 = vmatpush1.msra.mxu0 0.0
        %581 = vmatprep.subr.mxu0 0.0
        %582 = vmatpush1.msra.mxu0 0.0
        %583 = vmatprep.subr.mxu0 0.0
        %584 = vmatpush1.msra.mxu0 0.0
        %585 = vmatprep.subr.mxu0 0.0
        %586 = vmatpush1.msra.mxu0 0.0
        %587 = vmatprep.subr.mxu0 0.0
        %588 = vmatpush1.msra.mxu0 0.0
        %589 = vmatprep.subr.mxu0 0.0
        %590 = vmatpush1.msra.mxu0 0.0
        %591 = vmatprep.subr.mxu0 %v481
        %592 = vmatpush1.msra.mxu0 %v479
        %593 = vmatprep.subr.mxu0 0.0
        %594 = vmatpush2.msra.mxu0 0.0
        %595 = vmatprep.subr.mxu0 0.0
        %596 = vmatpush2.msra.mxu0 0.0
        %597 = vmatprep.subr.mxu0 0.0
        %598 = vmatpush2.msra.mxu0 0.0
        %599 = vmatprep.subr.mxu0 0.0
        %600 = vmatpush2.msra.mxu0 0.0
        %601 = vmatprep.subr.mxu0 0.0
        %602 = vmatpush2.msra.mxu0 0.0
        %603 = vmatprep.subr.mxu0 0.0
        %604 = vmatpush2.msra.mxu0 0.0
        %605 = vmatprep.subr.mxu0 0.0
        %606 = vmatpush2.msra.mxu0 0.0
        %607 = vmatprep.subr.mxu0 0.0
        %608 = vmatpush2.msra.mxu0 0.0
        %609 = vmatprep.subr.mxu0 0.0
        %610 = vmatpush2.msra.mxu0 0.0
        %611 = vmatprep.subr.mxu0 0.0
        %612 = vmatpush2.msra.mxu0 0.0
        %613 = vmatprep.subr.mxu0 0.0
        %614 = vmatpush2.msra.mxu0 0.0
        %615 = vmatprep.subr.mxu0 0.0
        %616 = vmatpush2.msra.mxu0 0.0
        %617 = vmatprep.subr.mxu0 0.0
        %618 = vmatpush2.msra.mxu0 0.0
        %619 = vmatprep.subr.mxu0 0.0
        %620 = vmatpush2.msra.mxu0 0.0
        %621 = vmatprep.subr.mxu0 0.0
        %622 = vmatpush2.msra.mxu0 0.0
        %623 = vmatprep.subr.mxu0 0.0
        %624 = vmatpush2.msra.mxu0 0.0
        %625 = vmatprep.mubr.f32.mxu0 0.0
        %626 = vmatmul.mubr.f32.gmra.mxu0 %v559
        %v627 = vpop.f32.mrf.mxu0
        %v628 = vadd.f32 %v556, %v627
        %v629 = vpop.f32.mrf.mxu0
        %v630 = vadd.f32 %v556, %v629
        %631 = vdwg.mxu0
        %633 = vset.pattern.permute.xlu0 0
        %634 = vperm.xlu0 %633, %v390
        %v635 = vpop.permute.xlu0 %634
        %638 = vset.pattern.permute.xlu0 0
        %639 = vperm.xlu0 %638, %v395
        %v640 = vpop.permute.xlu0 %639
        %643 = vset.pattern.permute.xlu0 0
        %644 = vperm.xlu0 %643, %v400
        %v645 = vpop.permute.xlu0 %644
        %648 = vset.pattern.permute.xlu0 0
        %649 = vperm.xlu0 %648, %v405
        %v650 = vpop.permute.xlu0 %649
        %653 = vset.pattern.permute.xlu0 0
        %654 = vperm.xlu0 %653, %v410
        %v655 = vpop.permute.xlu0 %654
        %658 = vset.pattern.permute.xlu0 0
        %659 = vperm.xlu0 %658, %v415
        %v660 = vpop.permute.xlu0 %659
        %663 = vset.pattern.permute.xlu0 0
        %664 = vperm.xlu0 %663, %v420
        %v665 = vpop.permute.xlu0 %664
        %668 = vset.pattern.permute.xlu0 0
        %669 = vperm.xlu0 %668, %v425
        %v670 = vpop.permute.xlu0 %669
        %673 = vset.pattern.permute.xlu0 0
        %674 = vperm.xlu0 %673, %v430
        %v675 = vpop.permute.xlu0 %674
        %678 = vset.pattern.permute.xlu0 0
        %679 = vperm.xlu0 %678, %v435
        %v680 = vpop.permute.xlu0 %679
        %683 = vset.pattern.permute.xlu0 0
        %684 = vperm.xlu0 %683, %v440
        %v685 = vpop.permute.xlu0 %684
        %688 = vset.pattern.permute.xlu0 0
        %689 = vperm.xlu0 %688, %v445
        %v690 = vpop.permute.xlu0 %689
        %693 = vset.pattern.permute.xlu0 0
        %694 = vperm.xlu0 %693, %v450
        %v695 = vpop.permute.xlu0 %694
        %698 = vset.pattern.permute.xlu0 0
        %699 = vperm.xlu0 %698, %v455
        %v700 = vpop.permute.xlu0 %699
        %703 = vset.pattern.permute.xlu0 0
        %704 = vperm.xlu0 %703, %v460
        %v705 = vpop.permute.xlu0 %704
        %708 = vset.pattern.permute.xlu0 0
        %709 = vperm.xlu0 %708, %v465
        %v710 = vpop.permute.xlu0 %709
        %v712 = vlaneseq
        %v713 = vshrl.u32 %v712, 7
        %v714 = vsub.s32 0, %v713
        %v715 = vrot.slane %v550, %v714
        %v716 = vlaneseq
        %v717 = vshrl.u32 %v716, 7
        %v718 = vsub.s32 0, %v717
        %v719 = vrot.slane %v552, %v718
        %v720 = vmul.f32 %v635, %v715
        %v721 = vmul.f32 %v635, %v719
        %v722 = vmul.f32 %v640, %v715
        %v723 = vmul.f32 %v640, %v719
        %v724 = vmul.f32 %v645, %v715
        %v725 = vmul.f32 %v645, %v719
        %v726 = vmul.f32 %v650, %v715
        %v727 = vmul.f32 %v650, %v719
        %v728 = vmul.f32 %v655, %v715
        %v729 = vmul.f32 %v655, %v719
        %v730 = vmul.f32 %v660, %v715
        %v731 = vmul.f32 %v660, %v719
        %v732 = vmul.f32 %v665, %v715
        %v733 = vmul.f32 %v665, %v719
        %v734 = vmul.f32 %v670, %v715
        %v735 = vmul.f32 %v670, %v719
        %v736 = vmul.f32 %v675, %v715
        %v737 = vmul.f32 %v675, %v719
        %v738 = vmul.f32 %v680, %v715
        %v739 = vmul.f32 %v680, %v719
        %v740 = vmul.f32 %v685, %v715
        %v741 = vmul.f32 %v685, %v719
        %v742 = vmul.f32 %v690, %v715
        %v743 = vmul.f32 %v690, %v719
        %v744 = vmul.f32 %v695, %v715
        %v745 = vmul.f32 %v695, %v719
        %v746 = vmul.f32 %v700, %v715
        %v747 = vmul.f32 %v700, %v719
        %v748 = vmul.f32 %v705, %v715
        %v749 = vmul.f32 %v705, %v719
        %v750 = vmul.f32 %v710, %v715
        %v751 = vmul.f32 %v710, %v719
        %752 = vset.pattern.permute.xlu0 1
        %753 = vperm.xlu0 %752, %v390
        %v754 = vpop.permute.xlu0 %753
        %756 = vset.pattern.permute.xlu0 1
        %757 = vperm.xlu0 %756, %v395
        %v758 = vpop.permute.xlu0 %757
        %760 = vset.pattern.permute.xlu0 1
        %761 = vperm.xlu0 %760, %v400
        %v762 = vpop.permute.xlu0 %761
        %764 = vset.pattern.permute.xlu0 1
        %765 = vperm.xlu0 %764, %v405
        %v766 = vpop.permute.xlu0 %765
        %768 = vset.pattern.permute.xlu0 1
        %769 = vperm.xlu0 %768, %v410
        %v770 = vpop.permute.xlu0 %769
        %772 = vset.pattern.permute.xlu0 1
        %773 = vperm.xlu0 %772, %v415
        %v774 = vpop.permute.xlu0 %773
        %776 = vset.pattern.permute.xlu0 1
        %777 = vperm.xlu0 %776, %v420
        %v778 = vpop.permute.xlu0 %777
        %780 = vset.pattern.permute.xlu0 1
        %781 = vperm.xlu0 %780, %v425
        %v782 = vpop.permute.xlu0 %781
        %784 = vset.pattern.permute.xlu0 1
        %785 = vperm.xlu0 %784, %v430
        %v786 = vpop.permute.xlu0 %785
        %788 = vset.pattern.permute.xlu0 1
        %789 = vperm.xlu0 %788, %v435
        %v790 = vpop.permute.xlu0 %789
        %792 = vset.pattern.permute.xlu0 1
        %793 = vperm.xlu0 %792, %v440
        %v794 = vpop.permute.xlu0 %793
        %796 = vset.pattern.permute.xlu0 1
        %797 = vperm.xlu0 %796, %v445
        %v798 = vpop.permute.xlu0 %797
        %800 = vset.pattern.permute.xlu0 1
        %801 = vperm.xlu0 %800, %v450
        %v802 = vpop.permute.xlu0 %801
        %804 = vset.pattern.permute.xlu0 1
        %805 = vperm.xlu0 %804, %v455
        %v806 = vpop.permute.xlu0 %805
        %808 = vset.pattern.permute.xlu0 1
        %809 = vperm.xlu0 %808, %v460
        %v810 = vpop.permute.xlu0 %809
        %812 = vset.pattern.permute.xlu0 1
        %813 = vperm.xlu0 %812, %v465
        %v814 = vpop.permute.xlu0 %813
        %v816 = vlaneseq
        %v817 = vshrl.u32 %v816, 7
        %v818 = vsub.s32 1, %v817
        %v819 = vrot.slane %v550, %v818
        %v820 = vlaneseq
        %v821 = vshrl.u32 %v820, 7
        %v822 = vsub.s32 1, %v821
        %v823 = vrot.slane %v552, %v822
        %v824 = vmul.f32 %v754, %v819
        %v825 = vmul.f32 %v754, %v823
        %v826 = vmul.f32 %v758, %v819
        %v827 = vmul.f32 %v758, %v823
        %v828 = vmul.f32 %v762, %v819
        %v829 = vmul.f32 %v762, %v823
        %v830 = vmul.f32 %v766, %v819
        %v831 = vmul.f32 %v766, %v823
        %v832 = vmul.f32 %v770, %v819
        %v833 = vmul.f32 %v770, %v823
        %v834 = vmul.f32 %v774, %v819
        %v835 = vmul.f32 %v774, %v823
        %v836 = vmul.f32 %v778, %v819
        %v837 = vmul.f32 %v778, %v823
        %v838 = vmul.f32 %v782, %v819
        %v839 = vmul.f32 %v782, %v823
        %v840 = vmul.f32 %v786, %v819
        %v841 = vmul.f32 %v786, %v823
        %v842 = vmul.f32 %v790, %v819
        %v843 = vmul.f32 %v790, %v823
        %v844 = vmul.f32 %v794, %v819
        %v845 = vmul.f32 %v794, %v823
        %v846 = vmul.f32 %v798, %v819
        %v847 = vmul.f32 %v798, %v823
        %v848 = vmul.f32 %v802, %v819
        %v849 = vmul.f32 %v802, %v823
        %v850 = vmul.f32 %v806, %v819
        %v851 = vmul.f32 %v806, %v823
        %v852 = vmul.f32 %v810, %v819
        %v853 = vmul.f32 %v810, %v823
        %v854 = vmul.f32 %v814, %v819
        %v855 = vmul.f32 %v814, %v823
        %v856 = vadd.f32 %v720, %v824
        %v857 = vadd.f32 %v721, %v825
        %v858 = vadd.f32 %v722, %v826
        %v859 = vadd.f32 %v723, %v827
        %v860 = vadd.f32 %v724, %v828
        %v861 = vadd.f32 %v725, %v829
        %v862 = vadd.f32 %v726, %v830
        %v863 = vadd.f32 %v727, %v831
        %v864 = vadd.f32 %v728, %v832
        %v865 = vadd.f32 %v729, %v833
        %v866 = vadd.f32 %v730, %v834
        %v867 = vadd.f32 %v731, %v835
        %v868 = vadd.f32 %v732, %v836
        %v869 = vadd.f32 %v733, %v837
        %v870 = vadd.f32 %v734, %v838
        %v871 = vadd.f32 %v735, %v839
        %v872 = vadd.f32 %v736, %v840
        %v873 = vadd.f32 %v737, %v841
        %v874 = vadd.f32 %v738, %v842
        %v875 = vadd.f32 %v739, %v843
        %v876 = vadd.f32 %v740, %v844
        %v877 = vadd.f32 %v741, %v845
        %v878 = vadd.f32 %v742, %v846
        %v879 = vadd.f32 %v743, %v847
        %v880 = vadd.f32 %v744, %v848
        %v881 = vadd.f32 %v745, %v849
        %v882 = vadd.f32 %v746, %v850
        %v883 = vadd.f32 %v747, %v851
        %v884 = vadd.f32 %v748, %v852
        %v885 = vadd.f32 %v749, %v853
        %v886 = vadd.f32 %v750, %v854
        %v887 = vadd.f32 %v751, %v855
        %v888 = vmax.f32 %v856, %v857
        %889 = vmax.xlane.f32.xlu0 %v888
        %v890 = vpop.xlane.xlu0 %889
        %v891 = vmax.f32 %v858, %v859
        %892 = vmax.xlane.f32.xlu0 %v891
        %v893 = vpop.xlane.xlu0 %892
        %v894 = vmax.f32 %v860, %v861
        %895 = vmax.xlane.f32.xlu0 %v894
        %v896 = vpop.xlane.xlu0 %895
        %v897 = vmax.f32 %v862, %v863
        %898 = vmax.xlane.f32.xlu0 %v897
        %v899 = vpop.xlane.xlu0 %898
        %v900 = vmax.f32 %v864, %v865
        %901 = vmax.xlane.f32.xlu0 %v900
        %v902 = vpop.xlane.xlu0 %901
        %v903 = vmax.f32 %v866, %v867
        %904 = vmax.xlane.f32.xlu0 %v903
        %v905 = vpop.xlane.xlu0 %904
        %v906 = vmax.f32 %v868, %v869
        %907 = vmax.xlane.f32.xlu0 %v906
        %v908 = vpop.xlane.xlu0 %907
        %v909 = vmax.f32 %v870, %v871
        %910 = vmax.xlane.f32.xlu0 %v909
        %v911 = vpop.xlane.xlu0 %910
        %v912 = vmax.f32 %v872, %v873
        %913 = vmax.xlane.f32.xlu0 %v912
        %v914 = vpop.xlane.xlu0 %913
        %v915 = vmax.f32 %v874, %v875
        %916 = vmax.xlane.f32.xlu0 %v915
        %v917 = vpop.xlane.xlu0 %916
        %v918 = vmax.f32 %v876, %v877
        %919 = vmax.xlane.f32.xlu0 %v918
        %v920 = vpop.xlane.xlu0 %919
        %v921 = vmax.f32 %v878, %v879
        %922 = vmax.xlane.f32.xlu0 %v921
        %v923 = vpop.xlane.xlu0 %922
        %v924 = vmax.f32 %v880, %v881
        %925 = vmax.xlane.f32.xlu0 %v924
        %v926 = vpop.xlane.xlu0 %925
        %v927 = vmax.f32 %v882, %v883
        %928 = vmax.xlane.f32.xlu0 %v927
        %v929 = vpop.xlane.xlu0 %928
        %v930 = vmax.f32 %v884, %v885
        %931 = vmax.xlane.f32.xlu0 %v930
        %v932 = vpop.xlane.xlu0 %931
        %v933 = vmax.f32 %v886, %v887
        %934 = vmax.xlane.f32.xlu0 %v933
        %v935 = vpop.xlane.xlu0 %934
        %v936 = vsub.f32 %v856, %v890
        %v937 = vsub.f32 %v857, %v890
        %v938 = vsub.f32 %v858, %v893
        %v939 = vsub.f32 %v859, %v893
        %v940 = vsub.f32 %v860, %v896
        %v941 = vsub.f32 %v861, %v896
        %v942 = vsub.f32 %v862, %v899
        %v943 = vsub.f32 %v863, %v899
        %v944 = vsub.f32 %v864, %v902
        %v945 = vsub.f32 %v865, %v902
        %v946 = vsub.f32 %v866, %v905
        %v947 = vsub.f32 %v867, %v905
        %v948 = vsub.f32 %v868, %v908
        %v949 = vsub.f32 %v869, %v908
        %v950 = vsub.f32 %v870, %v911
        %v951 = vsub.f32 %v871, %v911
        %v952 = vsub.f32 %v872, %v914
        %v953 = vsub.f32 %v873, %v914
        %v954 = vsub.f32 %v874, %v917
        %v955 = vsub.f32 %v875, %v917
        %v956 = vsub.f32 %v876, %v920
        %v957 = vsub.f32 %v877, %v920
        %v958 = vsub.f32 %v878, %v923
        %v959 = vsub.f32 %v879, %v923
        %v960 = vsub.f32 %v880, %v926
        %v961 = vsub.f32 %v881, %v926
        %v962 = vsub.f32 %v882, %v929
        %v963 = vsub.f32 %v883, %v929
        %v964 = vsub.f32 %v884, %v932
        %v965 = vsub.f32 %v885, %v932
        %v966 = vsub.f32 %v886, %v935
        %v967 = vsub.f32 %v887, %v935
        %v968 = vmul.f32 %v936, 1.442695
        %v969 = vpow.pop %v968
        %v970 = vmul.f32 %v937, 1.442695
        %v971 = vpow.pop %v970
        %v972 = vmul.f32 %v938, 1.442695
        %v973 = vpow.pop %v972
        %v974 = vmul.f32 %v939, 1.442695
        %v975 = vpow.pop %v974
        %v976 = vmul.f32 %v940, 1.442695
        %v977 = vpow.pop %v976
        %v978 = vmul.f32 %v941, 1.442695
        %v979 = vpow.pop %v978
        %v980 = vmul.f32 %v942, 1.442695
        %v981 = vpow.pop %v980
        %v982 = vmul.f32 %v943, 1.442695
        %v983 = vpow.pop %v982
        %v984 = vmul.f32 %v944, 1.442695
        %v985 = vpow.pop %v984
        %v986 = vmul.f32 %v945, 1.442695
        %v987 = vpow.pop %v986
        %v988 = vmul.f32 %v946, 1.442695
        %v989 = vpow.pop %v988
        %v990 = vmul.f32 %v947, 1.442695
        %v991 = vpow.pop %v990
        %v992 = vmul.f32 %v948, 1.442695
        %v993 = vpow.pop %v992
        %v994 = vmul.f32 %v949, 1.442695
        %v995 = vpow.pop %v994
        %v996 = vmul.f32 %v950, 1.442695
        %v997 = vpow.pop %v996
        %v998 = vmul.f32 %v951, 1.442695
        %v999 = vpow.pop %v998
        %v1000 = vmul.f32 %v952, 1.442695
        %v1001 = vpow.pop %v1000
        %v1002 = vmul.f32 %v953, 1.442695
        %v1003 = vpow.pop %v1002
        %v1004 = vmul.f32 %v954, 1.442695
        %v1005 = vpow.pop %v1004
        %v1006 = vmul.f32 %v955, 1.442695
        %v1007 = vpow.pop %v1006
        %v1008 = vmul.f32 %v956, 1.442695
        %v1009 = vpow.pop %v1008
        %v1010 = vmul.f32 %v957, 1.442695
        %v1011 = vpow.pop %v1010
        %v1012 = vmul.f32 %v958, 1.442695
        %v1013 = vpow.pop %v1012
        %v1014 = vmul.f32 %v959, 1.442695
        %v1015 = vpow.pop %v1014
        %v1016 = vmul.f32 %v960, 1.442695
        %v1017 = vpow.pop %v1016
        %v1018 = vmul.f32 %v961, 1.442695
        %v1019 = vpow.pop %v1018
        %v1020 = vmul.f32 %v962, 1.442695
        %v1021 = vpow.pop %v1020
        %v1022 = vmul.f32 %v963, 1.442695
        %v1023 = vpow.pop %v1022
        %v1024 = vmul.f32 %v964, 1.442695
        %v1025 = vpow.pop %v1024
        %v1026 = vmul.f32 %v965, 1.442695
        %v1027 = vpow.pop %v1026
        %v1028 = vmul.f32 %v966, 1.442695
        %v1029 = vpow.pop %v1028
        %v1030 = vmul.f32 %v967, 1.442695
        %v1031 = vpow.pop %v1030
        %v1032 = vadd.f32 %v969, %v971
        %1033 = vadd.xlane.f32.xlu0 %v1032
        %v1034 = vpop.xlane.xlu0 %1033
        %v1035 = vadd.f32 %v973, %v975
        %1036 = vadd.xlane.f32.xlu0 %v1035
        %v1037 = vpop.xlane.xlu0 %1036
        %v1038 = vadd.f32 %v977, %v979
        %1039 = vadd.xlane.f32.xlu0 %v1038
        %v1040 = vpop.xlane.xlu0 %1039
        %v1041 = vadd.f32 %v981, %v983
        %1042 = vadd.xlane.f32.xlu0 %v1041
        %v1043 = vpop.xlane.xlu0 %1042
        %v1044 = vadd.f32 %v985, %v987
        %1045 = vadd.xlane.f32.xlu0 %v1044
        %v1046 = vpop.xlane.xlu0 %1045
        %v1047 = vadd.f32 %v989, %v991
        %1048 = vadd.xlane.f32.xlu0 %v1047
        %v1049 = vpop.xlane.xlu0 %1048
        %v1050 = vadd.f32 %v993, %v995
        %1051 = vadd.xlane.f32.xlu0 %v1050
        %v1052 = vpop.xlane.xlu0 %1051
        %v1053 = vadd.f32 %v997, %v999
        %1054 = vadd.xlane.f32.xlu0 %v1053
        %v1055 = vpop.xlane.xlu0 %1054
        %v1056 = vadd.f32 %v1001, %v1003
        %1057 = vadd.xlane.f32.xlu0 %v1056
        %v1058 = vpop.xlane.xlu0 %1057
        %v1059 = vadd.f32 %v1005, %v1007
        %1060 = vadd.xlane.f32.xlu0 %v1059
        %v1061 = vpop.xlane.xlu0 %1060
        %v1062 = vadd.f32 %v1009, %v1011
        %1063 = vadd.xlane.f32.xlu0 %v1062
        %v1064 = vpop.xlane.xlu0 %1063
        %v1065 = vadd.f32 %v1013, %v1015
        %1066 = vadd.xlane.f32.xlu0 %v1065
        %v1067 = vpop.xlane.xlu0 %1066
        %v1068 = vadd.f32 %v1017, %v1019
        %1069 = vadd.xlane.f32.xlu0 %v1068
        %v1070 = vpop.xlane.xlu0 %1069
        %v1071 = vadd.f32 %v1021, %v1023
        %1072 = vadd.xlane.f32.xlu0 %v1071
        %v1073 = vpop.xlane.xlu0 %1072
        %v1074 = vadd.f32 %v1025, %v1027
        %1075 = vadd.xlane.f32.xlu0 %v1074
        %v1076 = vpop.xlane.xlu0 %1075
        %v1077 = vadd.f32 %v1029, %v1031
        %1078 = vadd.xlane.f32.xlu0 %v1077
        %v1079 = vpop.xlane.xlu0 %1078
        %v1080 = vrcp.pop %v1034
        %v1081 = vrcp.pop %v1037
        %v1082 = vrcp.pop %v1040
        %v1083 = vrcp.pop %v1043
        %v1084 = vrcp.pop %v1046
        %v1085 = vrcp.pop %v1049
        %v1086 = vrcp.pop %v1052
        %v1087 = vrcp.pop %v1055
        %v1088 = vrcp.pop %v1058
        %v1089 = vrcp.pop %v1061
        %v1090 = vrcp.pop %v1064
        %v1091 = vrcp.pop %v1067
        %v1092 = vrcp.pop %v1070
        %v1093 = vrcp.pop %v1073
        %v1094 = vrcp.pop %v1076
        %v1095 = vrcp.pop %v1079
        %v1096 = vmul.f32 %v969, %v1080
        %v1097 = vmul.f32 %v971, %v1080
        %v1098 = vmul.f32 %v973, %v1081
        %v1099 = vmul.f32 %v975, %v1081
        %v1100 = vmul.f32 %v977, %v1082
        %v1101 = vmul.f32 %v979, %v1082
        %v1102 = vmul.f32 %v981, %v1083
        %v1103 = vmul.f32 %v983, %v1083
        %v1104 = vmul.f32 %v985, %v1084
        %v1105 = vmul.f32 %v987, %v1084
        %v1106 = vmul.f32 %v989, %v1085
        %v1107 = vmul.f32 %v991, %v1085
        %v1108 = vmul.f32 %v993, %v1086
        %v1109 = vmul.f32 %v995, %v1086
        %v1110 = vmul.f32 %v997, %v1087
        %v1111 = vmul.f32 %v999, %v1087
        %v1112 = vmul.f32 %v1001, %v1088
        %v1113 = vmul.f32 %v1003, %v1088
        %v1114 = vmul.f32 %v1005, %v1089
        %v1115 = vmul.f32 %v1007, %v1089
        %v1116 = vmul.f32 %v1009, %v1090
        %v1117 = vmul.f32 %v1011, %v1090
        %v1118 = vmul.f32 %v1013, %v1091
        %v1119 = vmul.f32 %v1015, %v1091
        %v1120 = vmul.f32 %v1017, %v1092
        %v1121 = vmul.f32 %v1019, %v1092
        %v1122 = vmul.f32 %v1021, %v1093
        %v1123 = vmul.f32 %v1023, %v1093
        %v1124 = vmul.f32 %v1025, %v1094
        %v1125 = vmul.f32 %v1027, %v1094
        %v1126 = vmul.f32 %v1029, %v1095
        %v1127 = vmul.f32 %v1031, %v1095
        %1128 = vset.pattern.permute.xlu0 2
        %1129 = vperm.xlu0 %1128, %v266
        %v1130 = vpop.permute.xlu0 %1129
        %v1132 = vrot.slane %v264, 4
        %v1133 = vsel %vm271, %v1132, 0
        %1135 = vmatprep.subr.mxu0 0.0
        %1136 = vmatpush1.msra.mxu0 0.0
        %1137 = vmatprep.subr.mxu0 0.0
        %1138 = vmatpush1.msra.mxu0 0.0
        %1139 = vmatprep.subr.mxu0 0.0
        %1140 = vmatpush1.msra.mxu0 0.0
        %1141 = vmatprep.subr.mxu0 0.0
        %1142 = vmatpush1.msra.mxu0 0.0
        %1143 = vmatprep.subr.mxu0 0.0
        %1144 = vmatpush1.msra.mxu0 0.0
        %1145 = vmatprep.subr.mxu0 0.0
        %1146 = vmatpush1.msra.mxu0 0.0
        %1147 = vmatprep.subr.mxu0 0.0
        %1148 = vmatpush1.msra.mxu0 0.0
        %1149 = vmatprep.subr.mxu0 0.0
        %1150 = vmatpush1.msra.mxu0 0.0
        %1151 = vmatprep.subr.mxu0 0.0
        %1152 = vmatpush1.msra.mxu0 0.0
        %1153 = vmatprep.subr.mxu0 0.0
        %1154 = vmatpush1.msra.mxu0 0.0
        %1155 = vmatprep.subr.mxu0 0.0
        %1156 = vmatpush1.msra.mxu0 0.0
        %1157 = vmatprep.subr.mxu0 0.0
        %1158 = vmatpush1.msra.mxu0 0.0
        %1159 = vmatprep.subr.mxu0 0.0
        %1160 = vmatpush1.msra.mxu0 0.0
        %1161 = vmatprep.subr.mxu0 0.0
        %1162 = vmatpush1.msra.mxu0 0.0
        %1163 = vmatprep.subr.mxu0 0.0
        %1164 = vmatpush1.msra.mxu0 0.0
        %1165 = vmatprep.subr.mxu0 %v481
        %1166 = vmatpush1.msra.mxu0 %v479
        %1167 = vmatprep.subr.mxu0 0.0
        %1168 = vmatpush2.msra.mxu0 0.0
        %1169 = vmatprep.subr.mxu0 0.0
        %1170 = vmatpush2.msra.mxu0 0.0
        %1171 = vmatprep.subr.mxu0 0.0
        %1172 = vmatpush2.msra.mxu0 0.0
        %1173 = vmatprep.subr.mxu0 0.0
        %1174 = vmatpush2.msra.mxu0 0.0
        %1175 = vmatprep.subr.mxu0 0.0
        %1176 = vmatpush2.msra.mxu0 0.0
        %1177 = vmatprep.subr.mxu0 0.0
        %1178 = vmatpush2.msra.mxu0 0.0
        %1179 = vmatprep.subr.mxu0 0.0
        %1180 = vmatpush2.msra.mxu0 0.0
        %1181 = vmatprep.subr.mxu0 0.0
        %1182 = vmatpush2.msra.mxu0 0.0
        %1183 = vmatprep.subr.mxu0 0.0
        %1184 = vmatpush2.msra.mxu0 0.0
        %1185 = vmatprep.subr.mxu0 0.0
        %1186 = vmatpush2.msra.mxu0 0.0
        %1187 = vmatprep.subr.mxu0 0.0
        %1188 = vmatpush2.msra.mxu0 0.0
        %1189 = vmatprep.subr.mxu0 0.0
        %1190 = vmatpush2.msra.mxu0 0.0
        %1191 = vmatprep.subr.mxu0 0.0
        %1192 = vmatpush2.msra.mxu0 0.0
        %1193 = vmatprep.subr.mxu0 0.0
        %1194 = vmatpush2.msra.mxu0 0.0
        %1195 = vmatprep.subr.mxu0 0.0
        %1196 = vmatpush2.msra.mxu0 0.0
        %1197 = vmatprep.subr.mxu0 0.0
        %1198 = vmatpush2.msra.mxu0 0.0
        %1199 = vmatprep.mubr.f32.mxu0 0.0
        %1200 = vmatmul.mubr.f32.gmra.mxu0 %v1133
        %v1201 = vpop.f32.mrf.mxu0
        %v1202 = vadd.f32 %v1130, %v1201
        %v1203 = vpop.f32.mrf.mxu0
        %v1204 = vadd.f32 %v1130, %v1203
        %1205 = vdwg.mxu0
        %1206 = vset.pattern.permute.xlu0 2
        %1207 = vperm.xlu0 %1206, %v390
        %v1208 = vpop.permute.xlu0 %1207
        %1210 = vset.pattern.permute.xlu0 2
        %1211 = vperm.xlu0 %1210, %v395
        %v1212 = vpop.permute.xlu0 %1211
        %1214 = vset.pattern.permute.xlu0 2
        %1215 = vperm.xlu0 %1214, %v400
        %v1216 = vpop.permute.xlu0 %1215
        %1218 = vset.pattern.permute.xlu0 2
        %1219 = vperm.xlu0 %1218, %v405
        %v1220 = vpop.permute.xlu0 %1219
        %1222 = vset.pattern.permute.xlu0 2
        %1223 = vperm.xlu0 %1222, %v410
        %v1224 = vpop.permute.xlu0 %1223
        %1226 = vset.pattern.permute.xlu0 2
        %1227 = vperm.xlu0 %1226, %v415
        %v1228 = vpop.permute.xlu0 %1227
        %1230 = vset.pattern.permute.xlu0 2
        %1231 = vperm.xlu0 %1230, %v420
        %v1232 = vpop.permute.xlu0 %1231
        %1234 = vset.pattern.permute.xlu0 2
        %1235 = vperm.xlu0 %1234, %v425
        %v1236 = vpop.permute.xlu0 %1235
        %1238 = vset.pattern.permute.xlu0 2
        %1239 = vperm.xlu0 %1238, %v430
        %v1240 = vpop.permute.xlu0 %1239
        %1242 = vset.pattern.permute.xlu0 2
        %1243 = vperm.xlu0 %1242, %v435
        %v1244 = vpop.permute.xlu0 %1243
        %1246 = vset.pattern.permute.xlu0 2
        %1247 = vperm.xlu0 %1246, %v440
        %v1248 = vpop.permute.xlu0 %1247
        %1250 = vset.pattern.permute.xlu0 2
        %1251 = vperm.xlu0 %1250, %v445
        %v1252 = vpop.permute.xlu0 %1251
        %1254 = vset.pattern.permute.xlu0 2
        %1255 = vperm.xlu0 %1254, %v450
        %v1256 = vpop.permute.xlu0 %1255
        %1258 = vset.pattern.permute.xlu0 2
        %1259 = vperm.xlu0 %1258, %v455
        %v1260 = vpop.permute.xlu0 %1259
        %1262 = vset.pattern.permute.xlu0 2
        %1263 = vperm.xlu0 %1262, %v460
        %v1264 = vpop.permute.xlu0 %1263
        %1266 = vset.pattern.permute.xlu0 2
        %1267 = vperm.xlu0 %1266, %v465
        %v1268 = vpop.permute.xlu0 %1267
        %v1270 = vlaneseq
        %v1271 = vshrl.u32 %v1270, 7
        %v1272 = vsub.s32 2, %v1271
        %v1273 = vrot.slane %v550, %v1272
        %v1274 = vlaneseq
        %v1275 = vshrl.u32 %v1274, 7
        %v1276 = vsub.s32 2, %v1275
        %v1277 = vrot.slane %v552, %v1276
        %v1278 = vmul.f32 %v1208, %v1273
        %v1279 = vmul.f32 %v1208, %v1277
        %v1280 = vmul.f32 %v1212, %v1273
        %v1281 = vmul.f32 %v1212, %v1277
        %v1282 = vmul.f32 %v1216, %v1273
        %v1283 = vmul.f32 %v1216, %v1277
        %v1284 = vmul.f32 %v1220, %v1273
        %v1285 = vmul.f32 %v1220, %v1277
        %v1286 = vmul.f32 %v1224, %v1273
        %v1287 = vmul.f32 %v1224, %v1277
        %v1288 = vmul.f32 %v1228, %v1273
        %v1289 = vmul.f32 %v1228, %v1277
        %v1290 = vmul.f32 %v1232, %v1273
        %v1291 = vmul.f32 %v1232, %v1277
        %v1292 = vmul.f32 %v1236, %v1273
        %v1293 = vmul.f32 %v1236, %v1277
        %v1294 = vmul.f32 %v1240, %v1273
        %v1295 = vmul.f32 %v1240, %v1277
        %v1296 = vmul.f32 %v1244, %v1273
        %v1297 = vmul.f32 %v1244, %v1277
        %v1298 = vmul.f32 %v1248, %v1273
        %v1299 = vmul.f32 %v1248, %v1277
        %v1300 = vmul.f32 %v1252, %v1273
        %v1301 = vmul.f32 %v1252, %v1277
        %v1302 = vmul.f32 %v1256, %v1273
        %v1303 = vmul.f32 %v1256, %v1277
        %v1304 = vmul.f32 %v1260, %v1273
        %v1305 = vmul.f32 %v1260, %v1277
        %v1306 = vmul.f32 %v1264, %v1273
        %v1307 = vmul.f32 %v1264, %v1277
        %v1308 = vmul.f32 %v1268, %v1273
        %v1309 = vmul.f32 %v1268, %v1277
        %1310 = vset.pattern.permute.xlu0 3
        %1311 = vperm.xlu0 %1310, %v390
        %v1312 = vpop.permute.xlu0 %1311
        %1314 = vset.pattern.permute.xlu0 3
        %1315 = vperm.xlu0 %1314, %v395
        %v1316 = vpop.permute.xlu0 %1315
        %1318 = vset.pattern.permute.xlu0 3
        %1319 = vperm.xlu0 %1318, %v400
        %v1320 = vpop.permute.xlu0 %1319
        %1322 = vset.pattern.permute.xlu0 3
        %1323 = vperm.xlu0 %1322, %v405
        %v1324 = vpop.permute.xlu0 %1323
        %1326 = vset.pattern.permute.xlu0 3
        %1327 = vperm.xlu0 %1326, %v410
        %v1328 = vpop.permute.xlu0 %1327
        %1330 = vset.pattern.permute.xlu0 3
        %1331 = vperm.xlu0 %1330, %v415
        %v1332 = vpop.permute.xlu0 %1331
        %1334 = vset.pattern.permute.xlu0 3
        %1335 = vperm.xlu0 %1334, %v420
        %v1336 = vpop.permute.xlu0 %1335
        %1338 = vset.pattern.permute.xlu0 3
        %1339 = vperm.xlu0 %1338, %v425
        %v1340 = vpop.permute.xlu0 %1339
        %1342 = vset.pattern.permute.xlu0 3
        %1343 = vperm.xlu0 %1342, %v430
        %v1344 = vpop.permute.xlu0 %1343
        %1346 = vset.pattern.permute.xlu0 3
        %1347 = vperm.xlu0 %1346, %v435
        %v1348 = vpop.permute.xlu0 %1347
        %1350 = vset.pattern.permute.xlu0 3
        %1351 = vperm.xlu0 %1350, %v440
        %v1352 = vpop.permute.xlu0 %1351
        %1354 = vset.pattern.permute.xlu0 3
        %1355 = vperm.xlu0 %1354, %v445
        %v1356 = vpop.permute.xlu0 %1355
        %1358 = vset.pattern.permute.xlu0 3
        %1359 = vperm.xlu0 %1358, %v450
        %v1360 = vpop.permute.xlu0 %1359
        %1362 = vset.pattern.permute.xlu0 3
        %1363 = vperm.xlu0 %1362, %v455
        %v1364 = vpop.permute.xlu0 %1363
        %1366 = vset.pattern.permute.xlu0 3
        %1367 = vperm.xlu0 %1366, %v460
        %v1368 = vpop.permute.xlu0 %1367
        %1370 = vset.pattern.permute.xlu0 3
        %1371 = vperm.xlu0 %1370, %v465
        %v1372 = vpop.permute.xlu0 %1371
        %v1374 = vlaneseq
        %v1375 = vshrl.u32 %v1374, 7
        %v1376 = vsub.s32 3, %v1375
        %v1377 = vrot.slane %v550, %v1376
        %v1378 = vlaneseq
        %v1379 = vshrl.u32 %v1378, 7
        %v1380 = vsub.s32 3, %v1379
        %v1381 = vrot.slane %v552, %v1380
        %v1382 = vmul.f32 %v1312, %v1377
        %v1383 = vmul.f32 %v1312, %v1381
        %v1384 = vmul.f32 %v1316, %v1377
        %v1385 = vmul.f32 %v1316, %v1381
        %v1386 = vmul.f32 %v1320, %v1377
        %v1387 = vmul.f32 %v1320, %v1381
        %v1388 = vmul.f32 %v1324, %v1377
        %v1389 = vmul.f32 %v1324, %v1381
        %v1390 = vmul.f32 %v1328, %v1377
        %v1391 = vmul.f32 %v1328, %v1381
        %v1392 = vmul.f32 %v1332, %v1377
        %v1393 = vmul.f32 %v1332, %v1381
        %v1394 = vmul.f32 %v1336, %v1377
        %v1395 = vmul.f32 %v1336, %v1381
        %v1396 = vmul.f32 %v1340, %v1377
        %v1397 = vmul.f32 %v1340, %v1381
        %v1398 = vmul.f32 %v1344, %v1377
        %v1399 = vmul.f32 %v1344, %v1381
        %v1400 = vmul.f32 %v1348, %v1377
        %v1401 = vmul.f32 %v1348, %v1381
        %v1402 = vmul.f32 %v1352, %v1377
        %v1403 = vmul.f32 %v1352, %v1381
        %v1404 = vmul.f32 %v1356, %v1377
        %v1405 = vmul.f32 %v1356, %v1381
        %v1406 = vmul.f32 %v1360, %v1377
        %v1407 = vmul.f32 %v1360, %v1381
        %v1408 = vmul.f32 %v1364, %v1377
        %v1409 = vmul.f32 %v1364, %v1381
        %v1410 = vmul.f32 %v1368, %v1377
        %v1411 = vmul.f32 %v1368, %v1381
        %v1412 = vmul.f32 %v1372, %v1377
        %v1413 = vmul.f32 %v1372, %v1381
        %v1414 = vadd.f32 %v1278, %v1382
        %v1415 = vadd.f32 %v1279, %v1383
        %v1416 = vadd.f32 %v1280, %v1384
        %v1417 = vadd.f32 %v1281, %v1385
        %v1418 = vadd.f32 %v1282, %v1386
        %v1419 = vadd.f32 %v1283, %v1387
        %v1420 = vadd.f32 %v1284, %v1388
        %v1421 = vadd.f32 %v1285, %v1389
        %v1422 = vadd.f32 %v1286, %v1390
        %v1423 = vadd.f32 %v1287, %v1391
        %v1424 = vadd.f32 %v1288, %v1392
        %v1425 = vadd.f32 %v1289, %v1393
        %v1426 = vadd.f32 %v1290, %v1394
        %v1427 = vadd.f32 %v1291, %v1395
        %v1428 = vadd.f32 %v1292, %v1396
        %v1429 = vadd.f32 %v1293, %v1397
        %v1430 = vadd.f32 %v1294, %v1398
        %v1431 = vadd.f32 %v1295, %v1399
        %v1432 = vadd.f32 %v1296, %v1400
        %v1433 = vadd.f32 %v1297, %v1401
        %v1434 = vadd.f32 %v1298, %v1402
        %v1435 = vadd.f32 %v1299, %v1403
        %v1436 = vadd.f32 %v1300, %v1404
        %v1437 = vadd.f32 %v1301, %v1405
        %v1438 = vadd.f32 %v1302, %v1406
        %v1439 = vadd.f32 %v1303, %v1407
        %v1440 = vadd.f32 %v1304, %v1408
        %v1441 = vadd.f32 %v1305, %v1409
        %v1442 = vadd.f32 %v1306, %v1410
        %v1443 = vadd.f32 %v1307, %v1411
        %v1444 = vadd.f32 %v1308, %v1412
        %v1445 = vadd.f32 %v1309, %v1413
        %v1446 = vmax.f32 %v1414, %v1415
        %1447 = vmax.xlane.f32.xlu0 %v1446
        %v1448 = vpop.xlane.xlu0 %1447
        %v1449 = vmax.f32 %v1416, %v1417
        %1450 = vmax.xlane.f32.xlu0 %v1449
        %v1451 = vpop.xlane.xlu0 %1450
        %v1452 = vmax.f32 %v1418, %v1419
        %1453 = vmax.xlane.f32.xlu0 %v1452
        %v1454 = vpop.xlane.xlu0 %1453
        %v1455 = vmax.f32 %v1420, %v1421
        %1456 = vmax.xlane.f32.xlu0 %v1455
        %v1457 = vpop.xlane.xlu0 %1456
        %v1458 = vmax.f32 %v1422, %v1423
        %1459 = vmax.xlane.f32.xlu0 %v1458
        %v1460 = vpop.xlane.xlu0 %1459
        %v1461 = vmax.f32 %v1424, %v1425
        %1462 = vmax.xlane.f32.xlu0 %v1461
        %v1463 = vpop.xlane.xlu0 %1462
        %v1464 = vmax.f32 %v1426, %v1427
        %1465 = vmax.xlane.f32.xlu0 %v1464
        %v1466 = vpop.xlane.xlu0 %1465
        %v1467 = vmax.f32 %v1428, %v1429
        %1468 = vmax.xlane.f32.xlu0 %v1467
        %v1469 = vpop.xlane.xlu0 %1468
        %v1470 = vmax.f32 %v1430, %v1431
        %1471 = vmax.xlane.f32.xlu0 %v1470
        %v1472 = vpop.xlane.xlu0 %1471
        %v1473 = vmax.f32 %v1432, %v1433
        %1474 = vmax.xlane.f32.xlu0 %v1473
        %v1475 = vpop.xlane.xlu0 %1474
        %v1476 = vmax.f32 %v1434, %v1435
        %1477 = vmax.xlane.f32.xlu0 %v1476
        %v1478 = vpop.xlane.xlu0 %1477
        %v1479 = vmax.f32 %v1436, %v1437
        %1480 = vmax.xlane.f32.xlu0 %v1479
        %v1481 = vpop.xlane.xlu0 %1480
        %v1482 = vmax.f32 %v1438, %v1439
        %1483 = vmax.xlane.f32.xlu0 %v1482
        %v1484 = vpop.xlane.xlu0 %1483
        %v1485 = vmax.f32 %v1440, %v1441
        %1486 = vmax.xlane.f32.xlu0 %v1485
        %v1487 = vpop.xlane.xlu0 %1486
        %v1488 = vmax.f32 %v1442, %v1443
        %1489 = vmax.xlane.f32.xlu0 %v1488
        %v1490 = vpop.xlane.xlu0 %1489
        %v1491 = vmax.f32 %v1444, %v1445
        %1492 = vmax.xlane.f32.xlu0 %v1491
        %v1493 = vpop.xlane.xlu0 %1492
        %v1494 = vsub.f32 %v1414, %v1448
        %v1495 = vsub.f32 %v1415, %v1448
        %v1496 = vsub.f32 %v1416, %v1451
        %v1497 = vsub.f32 %v1417, %v1451
        %v1498 = vsub.f32 %v1418, %v1454
        %v1499 = vsub.f32 %v1419, %v1454
        %v1500 = vsub.f32 %v1420, %v1457
        %v1501 = vsub.f32 %v1421, %v1457
        %v1502 = vsub.f32 %v1422, %v1460
        %v1503 = vsub.f32 %v1423, %v1460
        %v1504 = vsub.f32 %v1424, %v1463
        %v1505 = vsub.f32 %v1425, %v1463
        %v1506 = vsub.f32 %v1426, %v1466
        %v1507 = vsub.f32 %v1427, %v1466
        %v1508 = vsub.f32 %v1428, %v1469
        %v1509 = vsub.f32 %v1429, %v1469
        %v1510 = vsub.f32 %v1430, %v1472
        %v1511 = vsub.f32 %v1431, %v1472
        %v1512 = vsub.f32 %v1432, %v1475
        %v1513 = vsub.f32 %v1433, %v1475
        %v1514 = vsub.f32 %v1434, %v1478
        %v1515 = vsub.f32 %v1435, %v1478
        %v1516 = vsub.f32 %v1436, %v1481
        %v1517 = vsub.f32 %v1437, %v1481
        %v1518 = vsub.f32 %v1438, %v1484
        %v1519 = vsub.f32 %v1439, %v1484
        %v1520 = vsub.f32 %v1440, %v1487
        %v1521 = vsub.f32 %v1441, %v1487
        %v1522 = vsub.f32 %v1442, %v1490
        %v1523 = vsub.f32 %v1443, %v1490
        %v1524 = vsub.f32 %v1444, %v1493
        %v1525 = vsub.f32 %v1445, %v1493
        %v1526 = vmul.f32 %v1494, 1.442695
        %v1527 = vpow.pop %v1526
        %v1528 = vmul.f32 %v1495, 1.442695
        %v1529 = vpow.pop %v1528
        %v1530 = vmul.f32 %v1496, 1.442695
        %v1531 = vpow.pop %v1530
        %v1532 = vmul.f32 %v1497, 1.442695
        %v1533 = vpow.pop %v1532
        %v1534 = vmul.f32 %v1498, 1.442695
        %v1535 = vpow.pop %v1534
        %v1536 = vmul.f32 %v1499, 1.442695
        %v1537 = vpow.pop %v1536
        %v1538 = vmul.f32 %v1500, 1.442695
        %v1539 = vpow.pop %v1538
        %v1540 = vmul.f32 %v1501, 1.442695
        %v1541 = vpow.pop %v1540
        %v1542 = vmul.f32 %v1502, 1.442695
        %v1543 = vpow.pop %v1542
        %v1544 = vmul.f32 %v1503, 1.442695
        %v1545 = vpow.pop %v1544
        %v1546 = vmul.f32 %v1504, 1.442695
        %v1547 = vpow.pop %v1546
        %v1548 = vmul.f32 %v1505, 1.442695
        %v1549 = vpow.pop %v1548
        %v1550 = vmul.f32 %v1506, 1.442695
        %v1551 = vpow.pop %v1550
        %v1552 = vmul.f32 %v1507, 1.442695
        %v1553 = vpow.pop %v1552
        %v1554 = vmul.f32 %v1508, 1.442695
        %v1555 = vpow.pop %v1554
        %v1556 = vmul.f32 %v1509, 1.442695
        %v1557 = vpow.pop %v1556
        %v1558 = vmul.f32 %v1510, 1.442695
        %v1559 = vpow.pop %v1558
        %v1560 = vmul.f32 %v1511, 1.442695
        %v1561 = vpow.pop %v1560
        %v1562 = vmul.f32 %v1512, 1.442695
        %v1563 = vpow.pop %v1562
        %v1564 = vmul.f32 %v1513, 1.442695
        %v1565 = vpow.pop %v1564
        %v1566 = vmul.f32 %v1514, 1.442695
        %v1567 = vpow.pop %v1566
        %v1568 = vmul.f32 %v1515, 1.442695
        %v1569 = vpow.pop %v1568
        %v1570 = vmul.f32 %v1516, 1.442695
        %v1571 = vpow.pop %v1570
        %v1572 = vmul.f32 %v1517, 1.442695
        %v1573 = vpow.pop %v1572
        %v1574 = vmul.f32 %v1518, 1.442695
        %v1575 = vpow.pop %v1574
        %v1576 = vmul.f32 %v1519, 1.442695
        %v1577 = vpow.pop %v1576
        %v1578 = vmul.f32 %v1520, 1.442695
        %v1579 = vpow.pop %v1578
        %v1580 = vmul.f32 %v1521, 1.442695
        %v1581 = vpow.pop %v1580
        %v1582 = vmul.f32 %v1522, 1.442695
        %v1583 = vpow.pop %v1582
        %v1584 = vmul.f32 %v1523, 1.442695
        %v1585 = vpow.pop %v1584
        %v1586 = vmul.f32 %v1524, 1.442695
        %v1587 = vpow.pop %v1586
        %v1588 = vmul.f32 %v1525, 1.442695
        %v1589 = vpow.pop %v1588
        %v1590 = vadd.f32 %v1527, %v1529
        %1591 = vadd.xlane.f32.xlu0 %v1590
        %v1592 = vpop.xlane.xlu0 %1591
        %v1593 = vadd.f32 %v1531, %v1533
        %1594 = vadd.xlane.f32.xlu0 %v1593
        %v1595 = vpop.xlane.xlu0 %1594
        %v1596 = vadd.f32 %v1535, %v1537
        %1597 = vadd.xlane.f32.xlu0 %v1596
        %v1598 = vpop.xlane.xlu0 %1597
        %v1599 = vadd.f32 %v1539, %v1541
        %1600 = vadd.xlane.f32.xlu0 %v1599
        %v1601 = vpop.xlane.xlu0 %1600
        %v1602 = vadd.f32 %v1543, %v1545
        %1603 = vadd.xlane.f32.xlu0 %v1602
        %v1604 = vpop.xlane.xlu0 %1603
        %v1605 = vadd.f32 %v1547, %v1549
        %1606 = vadd.xlane.f32.xlu0 %v1605
        %v1607 = vpop.xlane.xlu0 %1606
        %v1608 = vadd.f32 %v1551, %v1553
        %1609 = vadd.xlane.f32.xlu0 %v1608
        %v1610 = vpop.xlane.xlu0 %1609
        %v1611 = vadd.f32 %v1555, %v1557
        %1612 = vadd.xlane.f32.xlu0 %v1611
        %v1613 = vpop.xlane.xlu0 %1612
        %v1614 = vadd.f32 %v1559, %v1561
        %1615 = vadd.xlane.f32.xlu0 %v1614
        %v1616 = vpop.xlane.xlu0 %1615
        %v1617 = vadd.f32 %v1563, %v1565
        %1618 = vadd.xlane.f32.xlu0 %v1617
        %v1619 = vpop.xlane.xlu0 %1618
        %v1620 = vadd.f32 %v1567, %v1569
        %1621 = vadd.xlane.f32.xlu0 %v1620
        %v1622 = vpop.xlane.xlu0 %1621
        %v1623 = vadd.f32 %v1571, %v1573
        %1624 = vadd.xlane.f32.xlu0 %v1623
        %v1625 = vpop.xlane.xlu0 %1624
        %v1626 = vadd.f32 %v1575, %v1577
        %1627 = vadd.xlane.f32.xlu0 %v1626
        %v1628 = vpop.xlane.xlu0 %1627
        %v1629 = vadd.f32 %v1579, %v1581
        %1630 = vadd.xlane.f32.xlu0 %v1629
        %v1631 = vpop.xlane.xlu0 %1630
        %v1632 = vadd.f32 %v1583, %v1585
        %1633 = vadd.xlane.f32.xlu0 %v1632
        %v1634 = vpop.xlane.xlu0 %1633
        %v1635 = vadd.f32 %v1587, %v1589
        %1636 = vadd.xlane.f32.xlu0 %v1635
        %v1637 = vpop.xlane.xlu0 %1636
        %v1638 = vrcp.pop %v1592
        %v1639 = vrcp.pop %v1595
        %v1640 = vrcp.pop %v1598
        %v1641 = vrcp.pop %v1601
        %v1642 = vrcp.pop %v1604
        %v1643 = vrcp.pop %v1607
        %v1644 = vrcp.pop %v1610
        %v1645 = vrcp.pop %v1613
        %v1646 = vrcp.pop %v1616
        %v1647 = vrcp.pop %v1619
        %v1648 = vrcp.pop %v1622
        %v1649 = vrcp.pop %v1625
        %v1650 = vrcp.pop %v1628
        %v1651 = vrcp.pop %v1631
        %v1652 = vrcp.pop %v1634
        %v1653 = vrcp.pop %v1637
        %v1654 = vmul.f32 %v1527, %v1638
        %v1655 = vmul.f32 %v1529, %v1638
        %v1656 = vmul.f32 %v1531, %v1639
        %v1657 = vmul.f32 %v1533, %v1639
        %v1658 = vmul.f32 %v1535, %v1640
        %v1659 = vmul.f32 %v1537, %v1640
        %v1660 = vmul.f32 %v1539, %v1641
        %v1661 = vmul.f32 %v1541, %v1641
        %v1662 = vmul.f32 %v1543, %v1642
        %v1663 = vmul.f32 %v1545, %v1642
        %v1664 = vmul.f32 %v1547, %v1643
        %v1665 = vmul.f32 %v1549, %v1643
        %v1666 = vmul.f32 %v1551, %v1644
        %v1667 = vmul.f32 %v1553, %v1644
        %v1668 = vmul.f32 %v1555, %v1645
        %v1669 = vmul.f32 %v1557, %v1645
        %v1670 = vmul.f32 %v1559, %v1646
        %v1671 = vmul.f32 %v1561, %v1646
        %v1672 = vmul.f32 %v1563, %v1647
        %v1673 = vmul.f32 %v1565, %v1647
        %v1674 = vmul.f32 %v1567, %v1648
        %v1675 = vmul.f32 %v1569, %v1648
        %v1676 = vmul.f32 %v1571, %v1649
        %v1677 = vmul.f32 %v1573, %v1649
        %v1678 = vmul.f32 %v1575, %v1650
        %v1679 = vmul.f32 %v1577, %v1650
        %v1680 = vmul.f32 %v1579, %v1651
        %v1681 = vmul.f32 %v1581, %v1651
        %v1682 = vmul.f32 %v1583, %v1652
        %v1683 = vmul.f32 %v1585, %v1652
        %v1684 = vmul.f32 %v1587, %v1653
        %v1685 = vmul.f32 %v1589, %v1653
        %1686 = vmatprep.subr.mxu0 %v1685
        %1687 = vmatpush1.xpose.msra.mxu0 %v1684
        %1688 = vmatprep.subr.mxu0 %v1683
        %1689 = vmatpush1.xpose.msra.mxu0 %v1682
        %1690 = vmatprep.subr.mxu0 %v1681
        %1691 = vmatpush1.xpose.msra.mxu0 %v1680
        %1692 = vmatprep.subr.mxu0 %v1679
        %1693 = vmatpush1.xpose.msra.mxu0 %v1678
        %1694 = vmatprep.subr.mxu0 %v1677
        %1695 = vmatpush1.xpose.msra.mxu0 %v1676
        %1696 = vmatprep.subr.mxu0 %v1675
        %1697 = vmatpush1.xpose.msra.mxu0 %v1674
        %1698 = vmatprep.subr.mxu0 %v1673
        %1699 = vmatpush1.xpose.msra.mxu0 %v1672
        %1700 = vmatprep.subr.mxu0 %v1671
        %1701 = vmatpush1.xpose.msra.mxu0 %v1670
        %1702 = vmatprep.subr.mxu0 %v1669
        %1703 = vmatpush1.xpose.msra.mxu0 %v1668
        %1704 = vmatprep.subr.mxu0 %v1667
        %1705 = vmatpush1.xpose.msra.mxu0 %v1666
        %1706 = vmatprep.subr.mxu0 %v1665
        %1707 = vmatpush1.xpose.msra.mxu0 %v1664
        %1708 = vmatprep.subr.mxu0 %v1663
        %1709 = vmatpush1.xpose.msra.mxu0 %v1662
        %1710 = vmatprep.subr.mxu0 %v1661
        %1711 = vmatpush1.xpose.msra.mxu0 %v1660
        %1712 = vmatprep.subr.mxu0 %v1659
        %1713 = vmatpush1.xpose.msra.mxu0 %v1658
        %1714 = vmatprep.subr.mxu0 %v1657
        %1715 = vmatpush1.xpose.msra.mxu0 %v1656
        %1716 = vmatprep.subr.mxu0 %v1655
        %1717 = vmatpush1.xpose.msra.mxu0 %v1654
        %1718 = vmatprep.subr.mxu0 0.0
        %1719 = vmatpush2.xpose.msra.mxu0 0.0
        %1720 = vmatprep.subr.mxu0 0.0
        %1721 = vmatpush2.xpose.msra.mxu0 0.0
        %1722 = vmatprep.subr.mxu0 0.0
        %1723 = vmatpush2.xpose.msra.mxu0 0.0
        %1724 = vmatprep.subr.mxu0 0.0
        %1725 = vmatpush2.xpose.msra.mxu0 0.0
        %1726 = vmatprep.subr.mxu0 0.0
        %1727 = vmatpush2.xpose.msra.mxu0 0.0
        %1728 = vmatprep.subr.mxu0 0.0
        %1729 = vmatpush2.xpose.msra.mxu0 0.0
        %1730 = vmatprep.subr.mxu0 0.0
        %1731 = vmatpush2.xpose.msra.mxu0 0.0
        %1732 = vmatprep.subr.mxu0 0.0
        %1733 = vmatpush2.xpose.msra.mxu0 0.0
        %1734 = vmatprep.subr.mxu0 0.0
        %1735 = vmatpush2.xpose.msra.mxu0 0.0
        %1736 = vmatprep.subr.mxu0 0.0
        %1737 = vmatpush2.xpose.msra.mxu0 0.0
        %1738 = vmatprep.subr.mxu0 0.0
        %1739 = vmatpush2.xpose.msra.mxu0 0.0
        %1740 = vmatprep.subr.mxu0 0.0
        %1741 = vmatpush2.xpose.msra.mxu0 0.0
        %1742 = vmatprep.subr.mxu0 0.0
        %1743 = vmatpush2.xpose.msra.mxu0 0.0
        %1744 = vmatprep.subr.mxu0 0.0
        %1745 = vmatpush2.xpose.msra.mxu0 0.0
        %1746 = vmatprep.subr.mxu0 0.0
        %1747 = vmatpush2.xpose.msra.mxu0 0.0
        %1748 = vmatprep.subr.mxu0 0.0
        %1749 = vmatpush2.xpose.msra.mxu0 0.0
        %1750 = vmatprep.mubr.f32.mxu0 %v1204
        %1751 = vmatmul.mubr.f32.gmra.mxu0 %v1202
        %v1752 = vpop.f32.mrf.mxu0
        %v1753 = vadd.f32 0.0, %v1752
        %v1754 = vpop.f32.mrf.mxu0
        %1755 = vdwg.mxu0
        %1756 = vmatprep.subr.mxu0 %v1127
        %1757 = vmatpush1.xpose.msra.mxu0 %v1126
        %1758 = vmatprep.subr.mxu0 %v1125
        %1759 = vmatpush1.xpose.msra.mxu0 %v1124
        %1760 = vmatprep.subr.mxu0 %v1123
        %1761 = vmatpush1.xpose.msra.mxu0 %v1122
        %1762 = vmatprep.subr.mxu0 %v1121
        %1763 = vmatpush1.xpose.msra.mxu0 %v1120
        %1764 = vmatprep.subr.mxu0 %v1119
        %1765 = vmatpush1.xpose.msra.mxu0 %v1118
        %1766 = vmatprep.subr.mxu0 %v1117
        %1767 = vmatpush1.xpose.msra.mxu0 %v1116
        %1768 = vmatprep.subr.mxu0 %v1115
        %1769 = vmatpush1.xpose.msra.mxu0 %v1114
        %1770 = vmatprep.subr.mxu0 %v1113
        %1771 = vmatpush1.xpose.msra.mxu0 %v1112
        %1772 = vmatprep.subr.mxu0 %v1111
        %1773 = vmatpush1.xpose.msra.mxu0 %v1110
        %1774 = vmatprep.subr.mxu0 %v1109
        %1775 = vmatpush1.xpose.msra.mxu0 %v1108
        %1776 = vmatprep.subr.mxu0 %v1107
        %1777 = vmatpush1.xpose.msra.mxu0 %v1106
        %1778 = vmatprep.subr.mxu0 %v1105
        %1779 = vmatpush1.xpose.msra.mxu0 %v1104
        %1780 = vmatprep.subr.mxu0 %v1103
        %1781 = vmatpush1.xpose.msra.mxu0 %v1102
        %1782 = vmatprep.subr.mxu0 %v1101
        %1783 = vmatpush1.xpose.msra.mxu0 %v1100
        %1784 = vmatprep.subr.mxu0 %v1099
        %1785 = vmatpush1.xpose.msra.mxu0 %v1098
        %1786 = vmatprep.subr.mxu0 %v1097
        %1787 = vmatpush1.xpose.msra.mxu0 %v1096
        %1788 = vmatprep.subr.mxu0 0.0
        %1789 = vmatpush2.xpose.msra.mxu0 0.0
        %1790 = vmatprep.subr.mxu0 0.0
        %1791 = vmatpush2.xpose.msra.mxu0 0.0
        %1792 = vmatprep.subr.mxu0 0.0
        %1793 = vmatpush2.xpose.msra.mxu0 0.0
        %1794 = vmatprep.subr.mxu0 0.0
        %1795 = vmatpush2.xpose.msra.mxu0 0.0
        %1796 = vmatprep.subr.mxu0 0.0
        %1797 = vmatpush2.xpose.msra.mxu0 0.0
        %1798 = vmatprep.subr.mxu0 0.0
        %1799 = vmatpush2.xpose.msra.mxu0 0.0
        %1800 = vmatprep.subr.mxu0 0.0
        %1801 = vmatpush2.xpose.msra.mxu0 0.0
        %1802 = vmatprep.subr.mxu0 0.0
        %1803 = vmatpush2.xpose.msra.mxu0 0.0
        %1804 = vmatprep.subr.mxu0 0.0
        %1805 = vmatpush2.xpose.msra.mxu0 0.0
        %1806 = vmatprep.subr.mxu0 0.0
        %1807 = vmatpush2.xpose.msra.mxu0 0.0
        %1808 = vmatprep.subr.mxu0 0.0
        %1809 = vmatpush2.xpose.msra.mxu0 0.0
        %1810 = vmatprep.subr.mxu0 0.0
        %1811 = vmatpush2.xpose.msra.mxu0 0.0
        %1812 = vmatprep.subr.mxu0 0.0
        %1813 = vmatpush2.xpose.msra.mxu0 0.0
        %1814 = vmatprep.subr.mxu0 0.0
        %1815 = vmatpush2.xpose.msra.mxu0 0.0
        %1816 = vmatprep.subr.mxu0 0.0
        %1817 = vmatpush2.xpose.msra.mxu0 0.0
        %1818 = vmatprep.subr.mxu0 0.0
        %1819 = vmatpush2.xpose.msra.mxu0 0.0
        %1820 = vmatprep.mubr.f32.mxu0 %v630
        %1821 = vmatmul.mubr.f32.gmra.mxu0 %v628
        %v1822 = vpop.f32.mrf.mxu0
        %v1823 = vadd.f32 %v1753, %v1822
        %v1824 = vpop.f32.mrf.mxu0
        %1825 = vdwg.mxu0
        %1826 = vst [vmem:[%s230] sm:$0xf] %v1823
        %s1827 = sand.u32 %s136, 1
        %s1828 = scalar_lea.sflag [#allocation3], %s1827
        %s1829 = sand.u32 %s136, 1
        %s1830 = smul.addr %s1829, 4
        %s1831 = scalar_lea.vmem [#allocation2], %s1830
        // Predicated region
        $region37: #{tpu_custom_call.1} parent=35 // pred_check
          %p1832 = pneg %p146
        $region38: #{tpu_custom_call.1} parent=35 // pred_check_branch
          %1834 = sbr.rel (%p1832) target = $region40
        $region39: #{tpu_custom_call.1} parent=35 // pred_region
          %s1836 = ssub.s32 64, 64
          %1837 = vsyncadd %s1828, %s1836
          %s1838 = smul.addr %s22, 2
          %s1839 = sadd.s32 %s23, %s1838
          %s1840 = smul.addr %s1839, 64
          %s1841 = scalar_lea.hbm %s4, %s1840
          %s1843 = sshll.u32 %s1831, 4
          %s1844 = int_to_ptr.vmem [resolvable:$true] %s1843
          %1846 = dma.vmem_to_hbm [thread:$0]  %s1844, 64, %s1841, %s1828
        $region40: #{tpu_custom_call.1} parent=35 // pred_fallthru
          _
      $region36: #{tpu_custom_call.1} parent=5 // pred_fallthru
        _
      %p1847 = scmp.le.s32.totalorder 2, %s13
      // Predicated region
      $region41: #{tpu_custom_call.1} parent=5 // pred_check
        %p1848 = pneg %p1847
      $region42: #{tpu_custom_call.1} parent=5 // pred_check_branch
        %1850 = sbr.rel (%p1848) target = $region44
      $region43: #{tpu_custom_call.1} parent=5 // pred_region
        %s1851 = ssub.s32 %s13, 2
        // Predicated region
        $region45: #{tpu_custom_call.1} parent=43 // pred_check
          %p1852 = pneg %p152
        $region46: #{tpu_custom_call.1} parent=43 // pred_check_branch
          %1854 = sbr.rel (%p1852) target = $region48
        $region47: #{tpu_custom_call.1} parent=43 // pred_region
          %s1855 = sand.u32 %s137, 1
          %s1856 = scalar_lea.sflag [#allocation3], %s1855
          %s1857 = sand.u32 %s137, 1
          %s1858 = smul.addr %s1857, 4
          %s1859 = scalar_lea.vmem [#allocation2], %s1858
          %1860 = dma.done %s1856, 64
        $region48: #{tpu_custom_call.1} parent=43 // pred_fallthru
          _
      $region44: #{tpu_custom_call.1} parent=5 // pred_fallthru
        _
    $region6: #{tpu_custom_call.1} parent=1 // loop_footer
      %s17 = sadd.s32 1, %s13
    $region7: #{tpu_custom_call.1} parent=1 // loop_footer_branch
      %12 = sbr.rel target = $region3
    $region8: #{tpu_custom_call.1} parent=1 // loop_exit
      _
    %1861 = vsyncpa [#allocation3], 1
    %s1862 = scalar_lea.sflag [#allocation3], 1
    %1863 = vsyncpa %s1862, 1

</llo_original>
